<compile_context>
chip_gen: v7x
topology: tpu7x:2x2x1
jax: 0.10.0
libtpu: 0.0.40
codegen_flags: <defaults>
</compile_context>

<pallas_src>
import functools

import numpy as np
import jax
import jax.numpy as jnp
from jax import lax
from jax.experimental import pallas as pl
from jax.experimental.pallas import tpu as pltpu


def _interp_matrix(in_size: int, out_size: int) -> np.ndarray:
    """Bilinear interpolation matrix matching torch Upsample(align_corners=True)."""
    A = np.zeros((out_size, in_size), dtype=np.float32)
    if out_size == 1:
        A[0, 0] = 1.0
        return A
    scale = (in_size - 1) / (out_size - 1)
    for i in range(out_size):
        src = i * scale
        lo = min(int(np.floor(src)), in_size - 1)
        hi = min(lo + 1, in_size - 1)
        frac = src - lo
        A[i, lo] += 1.0 - frac
        A[i, hi] += frac
    return A


def _interp_taps(in_size: int, out_size: int):
    """Per-output-row (lo, hi, frac) taps (same math as _interp_matrix)."""
    if out_size == 1:
        return ((0, 0, 0.0),)
    scale = (in_size - 1) / (out_size - 1)
    taps = []
    for i in range(out_size):
        src = i * scale
        lo = min(int(np.floor(src)), in_size - 1)
        hi = min(lo + 1, in_size - 1)
        taps.append((lo, hi, float(src - lo)))
    return tuple(taps)


def _psp_upsample_kernel(x_ref, awt_ref, colmask_ref, w_ref, b_ref, alpha_ref,
                         o_ref, upf_ref, *, h_taps, pad_lead):
    _, Cin, H, W = x_ref.shape
    W2 = awt_ref.shape[1]
    Cout, S = o_ref.shape[1], o_ref.shape[2]

    # ---- W-axis upsample: one MXU matmul; result kept in vregs (no scratch) ----
    x = x_ref[0]                                                   # (Cin, H, W)
    xw = jnp.dot(x.reshape(Cin * H, W), awt_ref[...],
                 preferred_element_type=jnp.float32)               # (Cin*H, W2)
    xw = xw.reshape(Cin, H, W2)

    # ---- H-axis upsample: 2-tap lerp per output row (VPU), written into the
    #      flattened (Cin, S) buffer with zero halos.  Halos are re-zeroed every
    #      step so "parallel" (megacore) grid scheduling stays correct. ----
    zero_halo = jnp.zeros((Cin, pad_lead), jnp.float32)
    upf_ref[:, 0:pad_lead] = zero_halo
    upf_ref[:, pad_lead + S:pad_lead + S + pad_lead] = zero_halo
    for p, (lo, hi, frac) in enumerate(h_taps):
        r_lo = xw[:, lo, :]                                        # (Cin, W2)
        if hi == lo or frac == 0.0:
            row = r_lo
        else:
            row = (1.0 - frac) * r_lo + frac * xw[:, hi, :]
        upf_ref[:, pad_lead + p * W2:pad_lead + (p + 1) * W2] = row
    # TODO(synk): for large H2 replace this unrolled row loop with a second
    # A_h matmul + a single relayout (or a lax.fori_loop) to bound code size.

    # ---- 3x3 conv: nine (Cout, Cin) @ (Cin, S) matmuls accumulated in vregs,
    #      reading shifted static slices of the halo'd flattened image.  No
    #      materialized im2col buffer. ----
    def tap(dy, dx):
        start = pad_lead + (dy - 1) * W2 + (dx - 1)
        return upf_ref[:, start:start + S]                         # (Cin, S)

    acc = jnp.zeros((Cout, S), jnp.float32)
    for dx, mask in ((1, None),
                     (0, colmask_ref[0:1, :]),      # valid where q - 1 >= 0
                     (2, colmask_ref[1:2, :])):     # valid where q + 1 <  W2
        part = jnp.zeros((Cout, S), jnp.float32)
        for dy in range(3):
            part = part + jnp.dot(w_ref[dy * 3 + dx], tap(dy, dx),
                                  preferred_element_type=jnp.float32)
        acc = acc + (part if mask is None else part * mask)

    acc = acc + b_ref[...]                                         # (Cout, 1) broadcast
    alpha = alpha_ref[0]                                           # SMEM scalar
    o_ref[0] = jnp.where(acc >= 0.0, acc, alpha * acc).astype(o_ref.dtype)


def psp_upsample(x_nchw, weight, bias, alpha):
    """x_nchw: (N, Cin, H, W) f32; weight: (Cout, Cin, 3, 3); bias: (Cout,); alpha: scalar."""
    N, Cin, H, W = x_nchw.shape
    Cout = weight.shape[0]
    H2, W2 = 2 * H, 2 * W
    S = H2 * W2
    pad_lead = ((W2 + 1 + 127) // 128) * 128       # lane-aligned halo >= W2 + 1
    flat_cols = 2 * pad_lead + S

    # separable interpolation operators (no dense kron matrix)
    awt = jnp.asarray(_interp_matrix(W, W2).T)                     # (W, W2)
    h_taps = _interp_taps(H, H2)

    # conv weight as 9 per-tap (Cout, Cin) matrices, t = dy*3 + dx
    w_taps = jnp.transpose(weight, (2, 3, 0, 1)).reshape(9, Cout, Cin)
    b2 = jnp.reshape(bias, (Cout, 1))
    a_smem = jnp.reshape(jnp.asarray(alpha, jnp.float32), (1,))

    # column-validity masks for dx=0 / dx=2 (vectorized numpy; no per-elem loop)
    q = np.arange(S, dtype=np.int64) % W2
    colmask = jnp.asarray(np.stack([(q >= 1), (q <= W2 - 2)]).astype(np.float32))  # (2, S)

    # derive the VMEM budget from the actual block / scratch footprint
    bytes_in = 4 * (Cin * H * W + W * W2 + 2 * S + 9 * Cout * Cin + Cout)
    bytes_out = 4 * Cout * S
    bytes_scratch = 4 * Cin * flat_cols
    need = 2 * (bytes_in + bytes_out) + bytes_scratch              # double-buffered I/O
    try:
        phys = getattr(pltpu.get_tpu_info(), "vmem_capacity_bytes", 64 * 1024 * 1024)
    except Exception:
        phys = 64 * 1024 * 1024                                    # v7x-safe fallback
    vmem_limit = int(min(max(2 * need, 32 * 1024 * 1024), 0.8 * phys))

    kernel = functools.partial(_psp_upsample_kernel, h_taps=h_taps, pad_lead=pad_lead)

    grid_spec = pltpu.PrefetchScalarGridSpec(
        num_scalar_prefetch=0,
        grid=(N,),
        in_specs=[
            pl.BlockSpec((1, Cin, H, W), lambda n: (n, 0, 0, 0)),   # x (NCHW, one sample)
            pl.BlockSpec((W, W2), lambda n: (0, 0)),                # A_w^T (grid-invariant)
            pl.BlockSpec((2, S), lambda n: (0, 0)),                 # dx=0 / dx=2 column masks
            pl.BlockSpec((9, Cout, Cin), lambda n: (0, 0, 0)),      # conv taps
            pl.BlockSpec((Cout, 1), lambda n: (0, 0)),              # bias
            pl.BlockSpec(memory_space=pltpu.MemorySpace.SMEM),      # PReLU alpha (scalar)
        ],
        out_specs=pl.BlockSpec((1, Cout, S), lambda n: (n, 0, 0)),  # lane-dense store
        scratch_shapes=[
            pltpu.VMEM((Cin, flat_cols), jnp.float32),              # flattened image + halos
        ],
    )
    out_flat = pl.pallas_call(
        kernel,
        out_shape=jax.ShapeDtypeStruct((N, Cout, S), jnp.float32),
        grid_spec=grid_spec,
        compiler_params=pltpu.CompilerParams(
            dimension_semantics=("parallel",),      # batch samples are independent
            vmem_limit_bytes=vmem_limit,
        ),
    )(x_nchw, awt, colmask, w_taps, b2, a_smem)
    # TODO(synk): for large H,W add a spatial row-tile grid axis (halo'd H2 row
    # blocks) and/or pack multiple samples per step so the conv RHS is wide and
    # per-block VMEM stays bounded on v7x (64 MiB).
    return out_flat.reshape(N, Cout, H2, W2)


def psp_upsample_ref(x_nchw, weight, bias, alpha):
    """Pure-JAX reference with identical semantics (NCHW)."""
    N, Cin, H, W = x_nchw.shape
    Cout = weight.shape[0]
    H2, W2 = 2 * H, 2 * W
    ah = jnp.asarray(_interp_matrix(H, H2))
    aw = jnp.asarray(_interp_matrix(W, W2))
    up = jnp.einsum('ph,nchw->ncpw', ah, x_nchw)
    up = jnp.einsum('qw,ncpw->ncpq', aw, up)
    out = lax.conv_general_dilated(
        up, weight, window_strides=(1, 1), padding=((1, 1), (1, 1)),
        dimension_numbers=('NCHW', 'OIHW', 'NCHW'))
    out = out + bias.reshape(1, Cout, 1, 1)
    return jnp.where(out >= 0, out, alpha * out)


if __name__ == "__main__":
    key = jax.random.PRNGKey(0)
    kx, kw, kb = jax.random.split(key, 3)

    N, Cin, Cout, H, W = 2, 8, 8, 8, 8            # x2 upsample -> 16x16 output spatial
    x = jax.random.normal(kx, (N, Cin, H, W), jnp.float32)
    weight = jax.random.normal(kw, (Cout, Cin, 3, 3), jnp.float32) * 0.1
    bias = jax.random.normal(kb, (Cout,), jnp.float32) * 0.1
    alpha = jnp.float32(0.25)                      # PReLU default init (single parameter)

    out = jax.block_until_ready(psp_upsample(x, weight, bias, alpha))
    assert out.shape == (N, Cout, 2 * H, 2 * W)

    ref = jax.block_until_ready(psp_upsample_ref(x, weight, bias, alpha))
    np.testing.assert_allclose(np.asarray(out), np.asarray(ref), rtol=1e-4, atol=1e-4)
    print("KERNEL_OK")
</pallas_src>

<mosaic_0001>
module attributes {stable_mosaic.version = 11 : i64} {
  func.func @_psp_upsample_kernel(%arg0: i32, %arg1: memref<1x8x8x8xf32, #tpu.memory_space<vmem>>, %arg2: memref<8x16xf32, #tpu.memory_space<vmem>>, %arg3: memref<2x256xf32, #tpu.memory_space<vmem>>, %arg4: memref<9x8x8xf32, #tpu.memory_space<vmem>>, %arg5: memref<8x1xf32, #tpu.memory_space<vmem>>, %arg6: memref<1xf32, #tpu.memory_space<smem>>, %arg7: memref<1x8x256xf32, #tpu.memory_space<vmem>>, %arg8: memref<8x512xf32, #tpu.memory_space<vmem>>) attributes {dimension_semantics = [#tpu.dimension_semantics<parallel>], iteration_bounds = array<i64: 2>, scalar_prefetch = 0 : i64, scratch_operands = 1 : i64, tpu.core_type = #tpu.core_type<tc>, window_params = [{transform_indices = @transform_0, window_bounds = array<i64: 1, 8, 8, 8>}, {pipeline_mode = #tpu.pipeline_mode<synchronous>, transform_indices = @transform_1, window_bounds = array<i64: 8, 16>}, {pipeline_mode = #tpu.pipeline_mode<synchronous>, transform_indices = @transform_2, window_bounds = array<i64: 2, 256>}, {pipeline_mode = #tpu.pipeline_mode<synchronous>, transform_indices = @transform_3, window_bounds = array<i64: 9, 8, 8>}, {pipeline_mode = #tpu.pipeline_mode<synchronous>, transform_indices = @transform_4, window_bounds = array<i64: 8, 1>}, {transform_indices = @transform_5, window_bounds = array<i64: 1>}, {transform_indices = @transform_6, window_bounds = array<i64: 1, 8, 256>}]} {
    %c0 = arith.constant 0 : index
    %c0_0 = arith.constant 0 : index
    %c0_1 = arith.constant 0 : index
    %c0_2 = arith.constant 0 : index
    %0 = vector.load %arg1[%c0, %c0_0, %c0_1, %c0_2] : memref<1x8x8x8xf32, #tpu.memory_space<vmem>>, vector<1x8x8x8xf32>
    %1 = vector.shape_cast %0 : vector<1x8x8x8xf32> to vector<8x8x8xf32>
    %2 = vector.shape_cast %1 : vector<8x8x8xf32> to vector<64x8xf32>
    %c0_3 = arith.constant 0 : index
    %c0_4 = arith.constant 0 : index
    %3 = vector.load %arg2[%c0_3, %c0_4] : memref<8x16xf32, #tpu.memory_space<vmem>>, vector<8x16xf32>
    %cst = arith.constant dense<0.000000e+00> : vector<64x16xf32>
    %4 = tpu.matmul %2, %3, %cst {dimension_numbers = #tpu.dot_dimension_numbers<[1], [0], [0], [1], [0, 0, 1, 1], [], []>} : vector<64x8xf32>, vector<8x16xf32>, vector<64x16xf32> -> vector<64x16xf32>
    %5 = vector.shape_cast %4 : vector<64x16xf32> to vector<8x8x16xf32>
    %cst_5 = arith.constant 0.000000e+00 : f32
    %6 = vector.broadcast %cst_5 : f32 to vector<8x128xf32>
    %c0_6 = arith.constant 0 : index
    %c0_7 = arith.constant 0 : index
    %7 = vector.load %arg8[%c0_6, %c0_7] : memref<8x512xf32, #tpu.memory_space<vmem>>, vector<8x128xf32>
    tpu.vector_store %arg8[%c0_6, %c0_7], %6 {strides = array<i32>} : memref<8x512xf32, #tpu.memory_space<vmem>>, vector<8x128xf32>,
    %c0_8 = arith.constant 0 : index
    %c384 = arith.constant 384 : index
    %8 = vector.load %arg8[%c0_8, %c384] : memref<8x512xf32, #tpu.memory_space<vmem>>, vector<8x128xf32>
    tpu.vector_store %arg8[%c0_8, %c384], %6 {strides = array<i32>} : memref<8x512xf32, #tpu.memory_space<vmem>>, vector<8x128xf32>,
    %9 = vector.extract_strided_slice %5 {offsets = [0, 0, 0], sizes = [8, 1, 16], strides = [1, 1, 1]} : vector<8x8x16xf32> to vector<8x1x16xf32>
    %10 = vector.shape_cast %9 : vector<8x1x16xf32> to vector<8x16xf32>
    %c0_9 = arith.constant 0 : index
    %c128 = arith.constant 128 : index
    %11 = vector.load %arg8[%c0_9, %c128] : memref<8x512xf32, #tpu.memory_space<vmem>>, vector<8x16xf32>
    tpu.vector_store %arg8[%c0_9, %c128], %10 {strides = array<i32>} : memref<8x512xf32, #tpu.memory_space<vmem>>, vector<8x16xf32>,
    %12 = vector.extract_strided_slice %5 {offsets = [0, 0, 0], sizes = [8, 1, 16], strides = [1, 1, 1]} : vector<8x8x16xf32> to vector<8x1x16xf32>
    %13 = vector.shape_cast %12 : vector<8x1x16xf32> to vector<8x16xf32>
    %cst_10 = arith.constant 0.533333361 : f32
    %14 = vector.broadcast %cst_10 : f32 to vector<8x16xf32>
    %15 = arith.mulf %14, %13 : vector<8x16xf32>
    %16 = vector.extract_strided_slice %5 {offsets = [0, 1, 0], sizes = [8, 1, 16], strides = [1, 1, 1]} : vector<8x8x16xf32> to vector<8x1x16xf32>
    %17 = vector.shape_cast %16 : vector<8x1x16xf32> to vector<8x16xf32>
    %cst_11 = arith.constant 0.466666669 : f32
    %18 = vector.broadcast %cst_11 : f32 to vector<8x16xf32>
    %19 = arith.mulf %18, %17 : vector<8x16xf32>
    %20 = arith.addf %15, %19 : vector<8x16xf32>
    %c0_12 = arith.constant 0 : index
    %c144 = arith.constant 144 : index
    %21 = vector.load %arg8[%c0_12, %c144] : memref<8x512xf32, #tpu.memory_space<vmem>>, vector<8x16xf32>
    tpu.vector_store %arg8[%c0_12, %c144], %20 {strides = array<i32>} : memref<8x512xf32, #tpu.memory_space<vmem>>, vector<8x16xf32>,
    %22 = vector.extract_strided_slice %5 {offsets = [0, 0, 0], sizes = [8, 1, 16], strides = [1, 1, 1]} : vector<8x8x16xf32> to vector<8x1x16xf32>
    %23 = vector.shape_cast %22 : vector<8x1x16xf32> to vector<8x16xf32>
    %cst_13 = arith.constant 0.0666666701 : f32
    %24 = vector.broadcast %cst_13 : f32 to vector<8x16xf32>
    %25 = arith.mulf %24, %23 : vector<8x16xf32>
    %26 = vector.extract_strided_slice %5 {offsets = [0, 1, 0], sizes = [8, 1, 16], strides = [1, 1, 1]} : vector<8x8x16xf32> to vector<8x1x16xf32>
    %27 = vector.shape_cast %26 : vector<8x1x16xf32> to vector<8x16xf32>
    %cst_14 = arith.constant 0.933333337 : f32
    %28 = vector.broadcast %cst_14 : f32 to vector<8x16xf32>
    %29 = arith.mulf %28, %27 : vector<8x16xf32>
    %30 = arith.addf %25, %29 : vector<8x16xf32>
    %c0_15 = arith.constant 0 : index
    %c160 = arith.constant 160 : index
    %31 = vector.load %arg8[%c0_15, %c160] : memref<8x512xf32, #tpu.memory_space<vmem>>, vector<8x16xf32>
    tpu.vector_store %arg8[%c0_15, %c160], %30 {strides = array<i32>} : memref<8x512xf32, #tpu.memory_space<vmem>>, vector<8x16xf32>,
    %32 = vector.extract_strided_slice %5 {offsets = [0, 1, 0], sizes = [8, 1, 16], strides = [1, 1, 1]} : vector<8x8x16xf32> to vector<8x1x16xf32>
    %33 = vector.shape_cast %32 : vector<8x1x16xf32> to vector<8x16xf32>
    %cst_16 = arith.constant 6.000000e-01 : f32
    %34 = vector.broadcast %cst_16 : f32 to vector<8x16xf32>
    %35 = arith.mulf %34, %33 : vector<8x16xf32>
    %36 = vector.extract_strided_slice %5 {offsets = [0, 2, 0], sizes = [8, 1, 16], strides = [1, 1, 1]} : vector<8x8x16xf32> to vector<8x1x16xf32>
    %37 = vector.shape_cast %36 : vector<8x1x16xf32> to vector<8x16xf32>
    %cst_17 = arith.constant 4.000000e-01 : f32
    %38 = vector.broadcast %cst_17 : f32 to vector<8x16xf32>
    %39 = arith.mulf %38, %37 : vector<8x16xf32>
    %40 = arith.addf %35, %39 : vector<8x16xf32>
    %c0_18 = arith.constant 0 : index
    %c176 = arith.constant 176 : index
    %41 = vector.load %arg8[%c0_18, %c176] : memref<8x512xf32, #tpu.memory_space<vmem>>, vector<8x16xf32>
    tpu.vector_store %arg8[%c0_18, %c176], %40 {strides = array<i32>} : memref<8x512xf32, #tpu.memory_space<vmem>>, vector<8x16xf32>,
    %42 = vector.extract_strided_slice %5 {offsets = [0, 1, 0], sizes = [8, 1, 16], strides = [1, 1, 1]} : vector<8x8x16xf32> to vector<8x1x16xf32>
    %43 = vector.shape_cast %42 : vector<8x1x16xf32> to vector<8x16xf32>
    %cst_19 = arith.constant 0.13333334 : f32
    %44 = vector.broadcast %cst_19 : f32 to vector<8x16xf32>
    %45 = arith.mulf %44, %43 : vector<8x16xf32>
    %46 = vector.extract_strided_slice %5 {offsets = [0, 2, 0], sizes = [8, 1, 16], strides = [1, 1, 1]} : vector<8x8x16xf32> to vector<8x1x16xf32>
    %47 = vector.shape_cast %46 : vector<8x1x16xf32> to vector<8x16xf32>
    %cst_20 = arith.constant 0.866666674 : f32
    %48 = vector.broadcast %cst_20 : f32 to vector<8x16xf32>
    %49 = arith.mulf %48, %47 : vector<8x16xf32>
    %50 = arith.addf %45, %49 : vector<8x16xf32>
    %c0_21 = arith.constant 0 : index
    %c192 = arith.constant 192 : index
    %51 = vector.load %arg8[%c0_21, %c192] : memref<8x512xf32, #tpu.memory_space<vmem>>, vector<8x16xf32>
    tpu.vector_store %arg8[%c0_21, %c192], %50 {strides = array<i32>} : memref<8x512xf32, #tpu.memory_space<vmem>>, vector<8x16xf32>,
    %52 = vector.extract_strided_slice %5 {offsets = [0, 2, 0], sizes = [8, 1, 16], strides = [1, 1, 1]} : vector<8x8x16xf32> to vector<8x1x16xf32>
    %53 = vector.shape_cast %52 : vector<8x1x16xf32> to vector<8x16xf32>
    %cst_22 = arith.constant 0.666666686 : f32
    %54 = vector.broadcast %cst_22 : f32 to vector<8x16xf32>
    %55 = arith.mulf %54, %53 : vector<8x16xf32>
    %56 = vector.extract_strided_slice %5 {offsets = [0, 3, 0], sizes = [8, 1, 16], strides = [1, 1, 1]} : vector<8x8x16xf32> to vector<8x1x16xf32>
    %57 = vector.shape_cast %56 : vector<8x1x16xf32> to vector<8x16xf32>
    %cst_23 = arith.constant 0.333333343 : f32
    %58 = vector.broadcast %cst_23 : f32 to vector<8x16xf32>
    %59 = arith.mulf %58, %57 : vector<8x16xf32>
    %60 = arith.addf %55, %59 : vector<8x16xf32>
    %c0_24 = arith.constant 0 : index
    %c208 = arith.constant 208 : index
    %61 = vector.load %arg8[%c0_24, %c208] : memref<8x512xf32, #tpu.memory_space<vmem>>, vector<8x16xf32>
    tpu.vector_store %arg8[%c0_24, %c208], %60 {strides = array<i32>} : memref<8x512xf32, #tpu.memory_space<vmem>>, vector<8x16xf32>,
    %62 = vector.extract_strided_slice %5 {offsets = [0, 2, 0], sizes = [8, 1, 16], strides = [1, 1, 1]} : vector<8x8x16xf32> to vector<8x1x16xf32>
    %63 = vector.shape_cast %62 : vector<8x1x16xf32> to vector<8x16xf32>
    %cst_25 = arith.constant 2.000000e-01 : f32
    %64 = vector.broadcast %cst_25 : f32 to vector<8x16xf32>
    %65 = arith.mulf %64, %63 : vector<8x16xf32>
    %66 = vector.extract_strided_slice %5 {offsets = [0, 3, 0], sizes = [8, 1, 16], strides = [1, 1, 1]} : vector<8x8x16xf32> to vector<8x1x16xf32>
    %67 = vector.shape_cast %66 : vector<8x1x16xf32> to vector<8x16xf32>
    %cst_26 = arith.constant 8.000000e-01 : f32
    %68 = vector.broadcast %cst_26 : f32 to vector<8x16xf32>
    %69 = arith.mulf %68, %67 : vector<8x16xf32>
    %70 = arith.addf %65, %69 : vector<8x16xf32>
    %c0_27 = arith.constant 0 : index
    %c224 = arith.constant 224 : index
    %71 = vector.load %arg8[%c0_27, %c224] : memref<8x512xf32, #tpu.memory_space<vmem>>, vector<8x16xf32>
    tpu.vector_store %arg8[%c0_27, %c224], %70 {strides = array<i32>} : memref<8x512xf32, #tpu.memory_space<vmem>>, vector<8x16xf32>,
    %72 = vector.extract_strided_slice %5 {offsets = [0, 3, 0], sizes = [8, 1, 16], strides = [1, 1, 1]} : vector<8x8x16xf32> to vector<8x1x16xf32>
    %73 = vector.shape_cast %72 : vector<8x1x16xf32> to vector<8x16xf32>
    %cst_28 = arith.constant 0.733333349 : f32
    %74 = vector.broadcast %cst_28 : f32 to vector<8x16xf32>
    %75 = arith.mulf %74, %73 : vector<8x16xf32>
    %76 = vector.extract_strided_slice %5 {offsets = [0, 4, 0], sizes = [8, 1, 16], strides = [1, 1, 1]} : vector<8x8x16xf32> to vector<8x1x16xf32>
    %77 = vector.shape_cast %76 : vector<8x1x16xf32> to vector<8x16xf32>
    %cst_29 = arith.constant 0.266666681 : f32
    %78 = vector.broadcast %cst_29 : f32 to vector<8x16xf32>
    %79 = arith.mulf %78, %77 : vector<8x16xf32>
    %80 = arith.addf %75, %79 : vector<8x16xf32>
    %c0_30 = arith.constant 0 : index
    %c240 = arith.constant 240 : index
    %81 = vector.load %arg8[%c0_30, %c240] : memref<8x512xf32, #tpu.memory_space<vmem>>, vector<8x16xf32>
    tpu.vector_store %arg8[%c0_30, %c240], %80 {strides = array<i32>} : memref<8x512xf32, #tpu.memory_space<vmem>>, vector<8x16xf32>,
    %82 = vector.extract_strided_slice %5 {offsets = [0, 3, 0], sizes = [8, 1, 16], strides = [1, 1, 1]} : vector<8x8x16xf32> to vector<8x1x16xf32>
    %83 = vector.shape_cast %82 : vector<8x1x16xf32> to vector<8x16xf32>
    %cst_31 = arith.constant 0.266666681 : f32
    %84 = vector.broadcast %cst_31 : f32 to vector<8x16xf32>
    %85 = arith.mulf %84, %83 : vector<8x16xf32>
    %86 = vector.extract_strided_slice %5 {offsets = [0, 4, 0], sizes = [8, 1, 16], strides = [1, 1, 1]} : vector<8x8x16xf32> to vector<8x1x16xf32>
    %87 = vector.shape_cast %86 : vector<8x1x16xf32> to vector<8x16xf32>
    %cst_32 = arith.constant 0.733333349 : f32
    %88 = vector.broadcast %cst_32 : f32 to vector<8x16xf32>
    %89 = arith.mulf %88, %87 : vector<8x16xf32>
    %90 = arith.addf %85, %89 : vector<8x16xf32>
    %c0_33 = arith.constant 0 : index
    %c256 = arith.constant 256 : index
    %91 = vector.load %arg8[%c0_33, %c256] : memref<8x512xf32, #tpu.memory_space<vmem>>, vector<8x16xf32>
    tpu.vector_store %arg8[%c0_33, %c256], %90 {strides = array<i32>} : memref<8x512xf32, #tpu.memory_space<vmem>>, vector<8x16xf32>,
    %92 = vector.extract_strided_slice %5 {offsets = [0, 4, 0], sizes = [8, 1, 16], strides = [1, 1, 1]} : vector<8x8x16xf32> to vector<8x1x16xf32>
    %93 = vector.shape_cast %92 : vector<8x1x16xf32> to vector<8x16xf32>
    %cst_34 = arith.constant 8.000000e-01 : f32
    %94 = vector.broadcast %cst_34 : f32 to vector<8x16xf32>
    %95 = arith.mulf %94, %93 : vector<8x16xf32>
    %96 = vector.extract_strided_slice %5 {offsets = [0, 5, 0], sizes = [8, 1, 16], strides = [1, 1, 1]} : vector<8x8x16xf32> to vector<8x1x16xf32>
    %97 = vector.shape_cast %96 : vector<8x1x16xf32> to vector<8x16xf32>
    %cst_35 = arith.constant 2.000000e-01 : f32
    %98 = vector.broadcast %cst_35 : f32 to vector<8x16xf32>
    %99 = arith.mulf %98, %97 : vector<8x16xf32>
    %100 = arith.addf %95, %99 : vector<8x16xf32>
    %c0_36 = arith.constant 0 : index
    %c272 = arith.constant 272 : index
    %101 = vector.load %arg8[%c0_36, %c272] : memref<8x512xf32, #tpu.memory_space<vmem>>, vector<8x16xf32>
    tpu.vector_store %arg8[%c0_36, %c272], %100 {strides = array<i32>} : memref<8x512xf32, #tpu.memory_space<vmem>>, vector<8x16xf32>,
    %102 = vector.extract_strided_slice %5 {offsets = [0, 4, 0], sizes = [8, 1, 16], strides = [1, 1, 1]} : vector<8x8x16xf32> to vector<8x1x16xf32>
    %103 = vector.shape_cast %102 : vector<8x1x16xf32> to vector<8x16xf32>
    %cst_37 = arith.constant 0.333333343 : f32
    %104 = vector.broadcast %cst_37 : f32 to vector<8x16xf32>
    %105 = arith.mulf %104, %103 : vector<8x16xf32>
    %106 = vector.extract_strided_slice %5 {offsets = [0, 5, 0], sizes = [8, 1, 16], strides = [1, 1, 1]} : vector<8x8x16xf32> to vector<8x1x16xf32>
    %107 = vector.shape_cast %106 : vector<8x1x16xf32> to vector<8x16xf32>
    %cst_38 = arith.constant 0.666666686 : f32
    %108 = vector.broadcast %cst_38 : f32 to vector<8x16xf32>
    %109 = arith.mulf %108, %107 : vector<8x16xf32>
    %110 = arith.addf %105, %109 : vector<8x16xf32>
    %c0_39 = arith.constant 0 : index
    %c288 = arith.constant 288 : index
    %111 = vector.load %arg8[%c0_39, %c288] : memref<8x512xf32, #tpu.memory_space<vmem>>, vector<8x16xf32>
    tpu.vector_store %arg8[%c0_39, %c288], %110 {strides = array<i32>} : memref<8x512xf32, #tpu.memory_space<vmem>>, vector<8x16xf32>,
    %112 = vector.extract_strided_slice %5 {offsets = [0, 5, 0], sizes = [8, 1, 16], strides = [1, 1, 1]} : vector<8x8x16xf32> to vector<8x1x16xf32>
    %113 = vector.shape_cast %112 : vector<8x1x16xf32> to vector<8x16xf32>
    %cst_40 = arith.constant 0.866666674 : f32
    %114 = vector.broadcast %cst_40 : f32 to vector<8x16xf32>
    %115 = arith.mulf %114, %113 : vector<8x16xf32>
    %116 = vector.extract_strided_slice %5 {offsets = [0, 6, 0], sizes = [8, 1, 16], strides = [1, 1, 1]} : vector<8x8x16xf32> to vector<8x1x16xf32>
    %117 = vector.shape_cast %116 : vector<8x1x16xf32> to vector<8x16xf32>
    %cst_41 = arith.constant 0.13333334 : f32
    %118 = vector.broadcast %cst_41 : f32 to vector<8x16xf32>
    %119 = arith.mulf %118, %117 : vector<8x16xf32>
    %120 = arith.addf %115, %119 : vector<8x16xf32>
    %c0_42 = arith.constant 0 : index
    %c304 = arith.constant 304 : index
    %121 = vector.load %arg8[%c0_42, %c304] : memref<8x512xf32, #tpu.memory_space<vmem>>, vector<8x16xf32>
    tpu.vector_store %arg8[%c0_42, %c304], %120 {strides = array<i32>} : memref<8x512xf32, #tpu.memory_space<vmem>>, vector<8x16xf32>,
    %122 = vector.extract_strided_slice %5 {offsets = [0, 5, 0], sizes = [8, 1, 16], strides = [1, 1, 1]} : vector<8x8x16xf32> to vector<8x1x16xf32>
    %123 = vector.shape_cast %122 : vector<8x1x16xf32> to vector<8x16xf32>
    %cst_43 = arith.constant 4.000000e-01 : f32
    %124 = vector.broadcast %cst_43 : f32 to vector<8x16xf32>
    %125 = arith.mulf %124, %123 : vector<8x16xf32>
    %126 = vector.extract_strided_slice %5 {offsets = [0, 6, 0], sizes = [8, 1, 16], strides = [1, 1, 1]} : vector<8x8x16xf32> to vector<8x1x16xf32>
    %127 = vector.shape_cast %126 : vector<8x1x16xf32> to vector<8x16xf32>
    %cst_44 = arith.constant 6.000000e-01 : f32
    %128 = vector.broadcast %cst_44 : f32 to vector<8x16xf32>
    %129 = arith.mulf %128, %127 : vector<8x16xf32>
    %130 = arith.addf %125, %129 : vector<8x16xf32>
    %c0_45 = arith.constant 0 : index
    %c320 = arith.constant 320 : index
    %131 = vector.load %arg8[%c0_45, %c320] : memref<8x512xf32, #tpu.memory_space<vmem>>, vector<8x16xf32>
    tpu.vector_store %arg8[%c0_45, %c320], %130 {strides = array<i32>} : memref<8x512xf32, #tpu.memory_space<vmem>>, vector<8x16xf32>,
    %132 = vector.extract_strided_slice %5 {offsets = [0, 6, 0], sizes = [8, 1, 16], strides = [1, 1, 1]} : vector<8x8x16xf32> to vector<8x1x16xf32>
    %133 = vector.shape_cast %132 : vector<8x1x16xf32> to vector<8x16xf32>
    %cst_46 = arith.constant 0.933333337 : f32
    %134 = vector.broadcast %cst_46 : f32 to vector<8x16xf32>
    %135 = arith.mulf %134, %133 : vector<8x16xf32>
    %136 = vector.extract_strided_slice %5 {offsets = [0, 7, 0], sizes = [8, 1, 16], strides = [1, 1, 1]} : vector<8x8x16xf32> to vector<8x1x16xf32>
    %137 = vector.shape_cast %136 : vector<8x1x16xf32> to vector<8x16xf32>
    %cst_47 = arith.constant 0.0666666701 : f32
    %138 = vector.broadcast %cst_47 : f32 to vector<8x16xf32>
    %139 = arith.mulf %138, %137 : vector<8x16xf32>
    %140 = arith.addf %135, %139 : vector<8x16xf32>
    %c0_48 = arith.constant 0 : index
    %c336 = arith.constant 336 : index
    %141 = vector.load %arg8[%c0_48, %c336] : memref<8x512xf32, #tpu.memory_space<vmem>>, vector<8x16xf32>
    tpu.vector_store %arg8[%c0_48, %c336], %140 {strides = array<i32>} : memref<8x512xf32, #tpu.memory_space<vmem>>, vector<8x16xf32>,
    %142 = vector.extract_strided_slice %5 {offsets = [0, 6, 0], sizes = [8, 1, 16], strides = [1, 1, 1]} : vector<8x8x16xf32> to vector<8x1x16xf32>
    %143 = vector.shape_cast %142 : vector<8x1x16xf32> to vector<8x16xf32>
    %cst_49 = arith.constant 0.466666669 : f32
    %144 = vector.broadcast %cst_49 : f32 to vector<8x16xf32>
    %145 = arith.mulf %144, %143 : vector<8x16xf32>
    %146 = vector.extract_strided_slice %5 {offsets = [0, 7, 0], sizes = [8, 1, 16], strides = [1, 1, 1]} : vector<8x8x16xf32> to vector<8x1x16xf32>
    %147 = vector.shape_cast %146 : vector<8x1x16xf32> to vector<8x16xf32>
    %cst_50 = arith.constant 0.533333361 : f32
    %148 = vector.broadcast %cst_50 : f32 to vector<8x16xf32>
    %149 = arith.mulf %148, %147 : vector<8x16xf32>
    %150 = arith.addf %145, %149 : vector<8x16xf32>
    %c0_51 = arith.constant 0 : index
    %c352 = arith.constant 352 : index
    %151 = vector.load %arg8[%c0_51, %c352] : memref<8x512xf32, #tpu.memory_space<vmem>>, vector<8x16xf32>
    tpu.vector_store %arg8[%c0_51, %c352], %150 {strides = array<i32>} : memref<8x512xf32, #tpu.memory_space<vmem>>, vector<8x16xf32>,
    %152 = vector.extract_strided_slice %5 {offsets = [0, 7, 0], sizes = [8, 1, 16], strides = [1, 1, 1]} : vector<8x8x16xf32> to vector<8x1x16xf32>
    %153 = vector.shape_cast %152 : vector<8x1x16xf32> to vector<8x16xf32>
    %c0_52 = arith.constant 0 : index
    %c368 = arith.constant 368 : index
    %154 = vector.load %arg8[%c0_52, %c368] : memref<8x512xf32, #tpu.memory_space<vmem>>, vector<8x16xf32>
    tpu.vector_store %arg8[%c0_52, %c368], %153 {strides = array<i32>} : memref<8x512xf32, #tpu.memory_space<vmem>>, vector<8x16xf32>,
    %cst_53 = arith.constant 0.000000e+00 : f32
    %155 = vector.broadcast %cst_53 : f32 to vector<8x256xf32>
    %c0_54 = arith.constant 0 : index
    %c0_55 = arith.constant 0 : index
    %156 = vector.load %arg3[%c0_54, %c0_55] : memref<2x256xf32, #tpu.memory_space<vmem>>, vector<1x256xf32>
    %c1 = arith.constant 1 : index
    %c0_56 = arith.constant 0 : index
    %157 = vector.load %arg3[%c1, %c0_56] : memref<2x256xf32, #tpu.memory_space<vmem>>, vector<1x256xf32>
    %cst_57 = arith.constant 0.000000e+00 : f32
    %158 = vector.broadcast %cst_57 : f32 to vector<8x256xf32>
    %c1_58 = arith.constant 1 : index
    %c0_59 = arith.constant 0 : index
    %c0_60 = arith.constant 0 : index
    %159 = vector.load %arg4[%c1_58, %c0_59, %c0_60] : memref<9x8x8xf32, #tpu.memory_space<vmem>>, vector<1x8x8xf32>
    %160 = vector.shape_cast %159 : vector<1x8x8xf32> to vector<8x8xf32>
    %c0_61 = arith.constant 0 : index
    %c112 = arith.constant 112 : index
    %161 = vector.load %arg8[%c0_61, %c112] : memref<8x512xf32, #tpu.memory_space<vmem>>, vector<8x256xf32>
    %cst_62 = arith.constant dense<0.000000e+00> : vector<8x256xf32>
    %162 = tpu.matmul %160, %161, %cst_62 {dimension_numbers = #tpu.dot_dimension_numbers<[1], [0], [0], [1], [0, 0, 1, 1], [], []>} : vector<8x8xf32>, vector<8x256xf32>, vector<8x256xf32> -> vector<8x256xf32>
    %163 = arith.addf %158, %162 : vector<8x256xf32>
    %c4 = arith.constant 4 : index
    %c0_63 = arith.constant 0 : index
    %c0_64 = arith.constant 0 : index
    %164 = vector.load %arg4[%c4, %c0_63, %c0_64] : memref<9x8x8xf32, #tpu.memory_space<vmem>>, vector<1x8x8xf32>
    %165 = vector.shape_cast %164 : vector<1x8x8xf32> to vector<8x8xf32>
    %c0_65 = arith.constant 0 : index
    %c128_66 = arith.constant 128 : index
    %166 = vector.load %arg8[%c0_65, %c128_66] : memref<8x512xf32, #tpu.memory_space<vmem>>, vector<8x256xf32>
    %cst_67 = arith.constant dense<0.000000e+00> : vector<8x256xf32>
    %167 = tpu.matmul %165, %166, %cst_67 {dimension_numbers = #tpu.dot_dimension_numbers<[1], [0], [0], [1], [0, 0, 1, 1], [], []>} : vector<8x8xf32>, vector<8x256xf32>, vector<8x256xf32> -> vector<8x256xf32>
    %168 = arith.addf %163, %167 : vector<8x256xf32>
    %c7 = arith.constant 7 : index
    %c0_68 = arith.constant 0 : index
    %c0_69 = arith.constant 0 : index
    %169 = vector.load %arg4[%c7, %c0_68, %c0_69] : memref<9x8x8xf32, #tpu.memory_space<vmem>>, vector<1x8x8xf32>
    %170 = vector.shape_cast %169 : vector<1x8x8xf32> to vector<8x8xf32>
    %c0_70 = arith.constant 0 : index
    %c144_71 = arith.constant 144 : index
    %171 = vector.load %arg8[%c0_70, %c144_71] : memref<8x512xf32, #tpu.memory_space<vmem>>, vector<8x256xf32>
    %cst_72 = arith.constant dense<0.000000e+00> : vector<8x256xf32>
    %172 = tpu.matmul %170, %171, %cst_72 {dimension_numbers = #tpu.dot_dimension_numbers<[1], [0], [0], [1], [0, 0, 1, 1], [], []>} : vector<8x8xf32>, vector<8x256xf32>, vector<8x256xf32> -> vector<8x256xf32>
    %173 = arith.addf %168, %172 : vector<8x256xf32>
    %174 = arith.addf %155, %173 : vector<8x256xf32>
    %cst_73 = arith.constant 0.000000e+00 : f32
    %175 = vector.broadcast %cst_73 : f32 to vector<8x256xf32>
    %c0_74 = arith.constant 0 : index
    %c0_75 = arith.constant 0 : index
    %c0_76 = arith.constant 0 : index
    %176 = vector.load %arg4[%c0_74, %c0_75, %c0_76] : memref<9x8x8xf32, #tpu.memory_space<vmem>>, vector<1x8x8xf32>
    %177 = vector.shape_cast %176 : vector<1x8x8xf32> to vector<8x8xf32>
    %c0_77 = arith.constant 0 : index
    %c111 = arith.constant 111 : index
    %178 = vector.load %arg8[%c0_77, %c111] : memref<8x512xf32, #tpu.memory_space<vmem>>, vector<8x256xf32>
    %cst_78 = arith.constant dense<0.000000e+00> : vector<8x256xf32>
    %179 = tpu.matmul %177, %178, %cst_78 {dimension_numbers = #tpu.dot_dimension_numbers<[1], [0], [0], [1], [0, 0, 1, 1], [], []>} : vector<8x8xf32>, vector<8x256xf32>, vector<8x256xf32> -> vector<8x256xf32>
    %180 = arith.addf %175, %179 : vector<8x256xf32>
    %c3 = arith.constant 3 : index
    %c0_79 = arith.constant 0 : index
    %c0_80 = arith.constant 0 : index
    %181 = vector.load %arg4[%c3, %c0_79, %c0_80] : memref<9x8x8xf32, #tpu.memory_space<vmem>>, vector<1x8x8xf32>
    %182 = vector.shape_cast %181 : vector<1x8x8xf32> to vector<8x8xf32>
    %c0_81 = arith.constant 0 : index
    %c127 = arith.constant 127 : index
    %183 = vector.load %arg8[%c0_81, %c127] : memref<8x512xf32, #tpu.memory_space<vmem>>, vector<8x256xf32>
    %cst_82 = arith.constant dense<0.000000e+00> : vector<8x256xf32>
    %184 = tpu.matmul %182, %183, %cst_82 {dimension_numbers = #tpu.dot_dimension_numbers<[1], [0], [0], [1], [0, 0, 1, 1], [], []>} : vector<8x8xf32>, vector<8x256xf32>, vector<8x256xf32> -> vector<8x256xf32>
    %185 = arith.addf %180, %184 : vector<8x256xf32>
    %c6 = arith.constant 6 : index
    %c0_83 = arith.constant 0 : index
    %c0_84 = arith.constant 0 : index
    %186 = vector.load %arg4[%c6, %c0_83, %c0_84] : memref<9x8x8xf32, #tpu.memory_space<vmem>>, vector<1x8x8xf32>
    %187 = vector.shape_cast %186 : vector<1x8x8xf32> to vector<8x8xf32>
    %c0_85 = arith.constant 0 : index
    %c143 = arith.constant 143 : index
    %188 = vector.load %arg8[%c0_85, %c143] : memref<8x512xf32, #tpu.memory_space<vmem>>, vector<8x256xf32>
    %cst_86 = arith.constant dense<0.000000e+00> : vector<8x256xf32>
    %189 = tpu.matmul %187, %188, %cst_86 {dimension_numbers = #tpu.dot_dimension_numbers<[1], [0], [0], [1], [0, 0, 1, 1], [], []>} : vector<8x8xf32>, vector<8x256xf32>, vector<8x256xf32> -> vector<8x256xf32>
    %190 = arith.addf %185, %189 : vector<8x256xf32>
    %191 = vector.broadcast %156 : vector<1x256xf32> to vector<8x256xf32>
    %192 = arith.mulf %190, %191 : vector<8x256xf32>
    %193 = arith.addf %174, %192 : vector<8x256xf32>
    %cst_87 = arith.constant 0.000000e+00 : f32
    %194 = vector.broadcast %cst_87 : f32 to vector<8x256xf32>
    %c2 = arith.constant 2 : index
    %c0_88 = arith.constant 0 : index
    %c0_89 = arith.constant 0 : index
    %195 = vector.load %arg4[%c2, %c0_88, %c0_89] : memref<9x8x8xf32, #tpu.memory_space<vmem>>, vector<1x8x8xf32>
    %196 = vector.shape_cast %195 : vector<1x8x8xf32> to vector<8x8xf32>
    %c0_90 = arith.constant 0 : index
    %c113 = arith.constant 113 : index
    %197 = vector.load %arg8[%c0_90, %c113] : memref<8x512xf32, #tpu.memory_space<vmem>>, vector<8x256xf32>
    %cst_91 = arith.constant dense<0.000000e+00> : vector<8x256xf32>
    %198 = tpu.matmul %196, %197, %cst_91 {dimension_numbers = #tpu.dot_dimension_numbers<[1], [0], [0], [1], [0, 0, 1, 1], [], []>} : vector<8x8xf32>, vector<8x256xf32>, vector<8x256xf32> -> vector<8x256xf32>
    %199 = arith.addf %194, %198 : vector<8x256xf32>
    %c5 = arith.constant 5 : index
    %c0_92 = arith.constant 0 : index
    %c0_93 = arith.constant 0 : index
    %200 = vector.load %arg4[%c5, %c0_92, %c0_93] : memref<9x8x8xf32, #tpu.memory_space<vmem>>, vector<1x8x8xf32>
    %201 = vector.shape_cast %200 : vector<1x8x8xf32> to vector<8x8xf32>
    %c0_94 = arith.constant 0 : index
    %c129 = arith.constant 129 : index
    %202 = vector.load %arg8[%c0_94, %c129] : memref<8x512xf32, #tpu.memory_space<vmem>>, vector<8x256xf32>
    %cst_95 = arith.constant dense<0.000000e+00> : vector<8x256xf32>
    %203 = tpu.matmul %201, %202, %cst_95 {dimension_numbers = #tpu.dot_dimension_numbers<[1], [0], [0], [1], [0, 0, 1, 1], [], []>} : vector<8x8xf32>, vector<8x256xf32>, vector<8x256xf32> -> vector<8x256xf32>
    %204 = arith.addf %199, %203 : vector<8x256xf32>
    %c8 = arith.constant 8 : index
    %c0_96 = arith.constant 0 : index
    %c0_97 = arith.constant 0 : index
    %205 = vector.load %arg4[%c8, %c0_96, %c0_97] : memref<9x8x8xf32, #tpu.memory_space<vmem>>, vector<1x8x8xf32>
    %206 = vector.shape_cast %205 : vector<1x8x8xf32> to vector<8x8xf32>
    %c0_98 = arith.constant 0 : index
    %c145 = arith.constant 145 : index
    %207 = vector.load %arg8[%c0_98, %c145] : memref<8x512xf32, #tpu.memory_space<vmem>>, vector<8x256xf32>
    %cst_99 = arith.constant dense<0.000000e+00> : vector<8x256xf32>
    %208 = tpu.matmul %206, %207, %cst_99 {dimension_numbers = #tpu.dot_dimension_numbers<[1], [0], [0], [1], [0, 0, 1, 1], [], []>} : vector<8x8xf32>, vector<8x256xf32>, vector<8x256xf32> -> vector<8x256xf32>
    %209 = arith.addf %204, %208 : vector<8x256xf32>
    %210 = vector.broadcast %157 : vector<1x256xf32> to vector<8x256xf32>
    %211 = arith.mulf %209, %210 : vector<8x256xf32>
    %212 = arith.addf %193, %211 : vector<8x256xf32>
    %c0_100 = arith.constant 0 : index
    %c0_101 = arith.constant 0 : index
    %213 = vector.load %arg5[%c0_100, %c0_101] : memref<8x1xf32, #tpu.memory_space<vmem>>, vector<8x1xf32>
    %214 = vector.broadcast %213 : vector<8x1xf32> to vector<8x256xf32>
    %215 = arith.addf %212, %214 : vector<8x256xf32>
    %c0_102 = arith.constant 0 : index
    %216 = memref.load %arg6[%c0_102] : memref<1xf32, #tpu.memory_space<smem>>
    %cst_103 = arith.constant 0.000000e+00 : f32
    %217 = vector.broadcast %cst_103 : f32 to vector<8x256xf32>
    %218 = arith.cmpf oge, %215, %217 : vector<8x256xf32>
    %219 = vector.broadcast %216 : f32 to vector<8x256xf32>
    %220 = arith.mulf %219, %215 : vector<8x256xf32>
    %221 = arith.select %218, %215, %220 : vector<8x256xi1>, vector<8x256xf32>
    %c0_104 = arith.constant 0 : index
    %c0_105 = arith.constant 0 : index
    %c0_106 = arith.constant 0 : index
    %222 = vector.load %arg7[%c0_104, %c0_105, %c0_106] : memref<1x8x256xf32, #tpu.memory_space<vmem>>, vector<1x8x256xf32>
    %223 = vector.shape_cast %222 : vector<1x8x256xf32> to vector<8x256xf32>
    %224 = vector.shape_cast %221 : vector<8x256xf32> to vector<1x8x256xf32>
    tpu.vector_store %arg7[%c0_104, %c0_105, %c0_106], %224 {strides = array<i32>} : memref<1x8x256xf32, #tpu.memory_space<vmem>>, vector<1x8x256xf32>,
    return
  }
  func.func @transform_0(%arg0: i32) -> (i32, i32, i32, i32) {
    %c0_i32 = arith.constant 0 : i32
    %c0_i32_0 = arith.constant 0 : i32
    %c0_i32_1 = arith.constant 0 : i32
    %c0_i32_2 = arith.constant 0 : i32
    return %arg0, %c0_i32, %c0_i32_0, %c0_i32_1 : i32, i32, i32, i32
  }
  func.func @transform_1(%arg0: i32) -> (i32, i32) {
    %c0_i32 = arith.constant 0 : i32
    %c0_i32_0 = arith.constant 0 : i32
    %c0_i32_1 = arith.constant 0 : i32
    return %c0_i32, %c0_i32_0 : i32, i32
  }
  func.func @transform_2(%arg0: i32) -> (i32, i32) {
    %c0_i32 = arith.constant 0 : i32
    %c0_i32_0 = arith.constant 0 : i32
    %c0_i32_1 = arith.constant 0 : i32
    return %c0_i32, %c0_i32_0 : i32, i32
  }
  func.func @transform_3(%arg0: i32) -> (i32, i32, i32) {
    %c0_i32 = arith.constant 0 : i32
    %c0_i32_0 = arith.constant 0 : i32
    %c0_i32_1 = arith.constant 0 : i32
    %c0_i32_2 = arith.constant 0 : i32
    return %c0_i32, %c0_i32_0, %c0_i32_1 : i32, i32, i32
  }
  func.func @transform_4(%arg0: i32) -> (i32, i32) {
    %c0_i32 = arith.constant 0 : i32
    %c0_i32_0 = arith.constant 0 : i32
    %c0_i32_1 = arith.constant 0 : i32
    return %c0_i32, %c0_i32_0 : i32, i32
  }
  func.func @transform_5(%arg0: i32) -> i32 {
    %c0_i32 = arith.constant 0 : i32
    %c0_i32_0 = arith.constant 0 : i32
    return %c0_i32 : i32
  }
  func.func @transform_6(%arg0: i32) -> (i32, i32, i32) {
    %c0_i32 = arith.constant 0 : i32
    %c0_i32_0 = arith.constant 0 : i32
    %c0_i32_1 = arith.constant 0 : i32
    return %arg0, %c0_i32, %c0_i32_0 : i32, i32, i32
  }
}

</mosaic_0001>

<llo_original>
// kernel: tpu_custom_call.1
$region0: #{tpu_custom_call.1}
  #allocation0 [shape = 'u32[]', space=smem, size = 0x4, offset = 0x4, fixed_abs, tag = 'smem constant byte address 0x4 - core index']
  #allocation1 [shape = 'u32[144,128]{1,0:T(1,128)}', space=vmem, size = 0x12000, scoped, tag = 'internal scratch']
  #allocation2 [shape = 'f32[8,512]{1,0:T(8,128)}', space=vmem, size = 0x4000, scoped, tag = 'scratch operand']
  #allocation3 [shape = 'f32[1]{0:T(128)S(6)}', space=smem, size = 0x200, scoped, tag = 'scoped memory for tpu_custom_call.1']
  %s0 = inlined_call_operand.vmem [shape: f32[2,8,8,8], index: 0, kind: input, shape index: {}]
  %s1 = inlined_call_operand.vmem [shape: f32[8,16], index: 1, kind: input, shape index: {}]
  %s2 = inlined_call_operand.vmem [shape: f32[2,256], index: 2, kind: input, shape index: {}]
  %s3 = inlined_call_operand.vmem [shape: f32[9,8,8], index: 3, kind: input, shape index: {}]
  %s4 = inlined_call_operand.vmem [shape: f32[8,1], index: 4, kind: input, shape index: {}]
  %s5 = inlined_call_operand.<no memory space> [shape: f32[1], index: 5, kind: input, shape index: {}]
  %s6 = inlined_call_operand.hbm [shape: f32[2,8,256], index: 6, kind: output, shape index: {}]
  %s7 = sld [smem:[#allocation0]]
  $region57: #{tpu_custom_call.1} parent=0
    _
  %s9 = ssub.s32 1, %s7
  %s10 = scalar_select 0, %s9, %s7
  %11 = sst [smem:[#allocation3]] %s5
  $region1: #{tpu_custom_call.1} parent=0
    #allocation4 [shape = 'u8[16384]{0}', space=vmem, size = 0x4000, scoped, tag = 'output window, operand 0']
    #allocation5 [shape = 's32[2]{0}', space=sflag, size = 0x8, scoped, tag = 'scoped memory for tpu_custom_call.1']
    %12 = vsyncpa [#allocation5], 0
    %s13 = scalar_lea.sflag [#allocation5], 1
    %14 = vsyncpa %s13, 0
    loop: start=0, step=1, limit=4
    $region2: #{tpu_custom_call.1} parent=1 // loop_pre_header
      _
    $region3: #{tpu_custom_call.1} parent=1 // loop_header
      %s16 = sphi 0, %s20
      %p17 = scmp.ge.s32.totalorder %s16, 4
      %s26 = sphi 0, %s28
      %s29 = sphi 0, %s26
      %s30 = sphi 0, %s29
      %s46 = sphi 0, %s30
      %s50 = sphi 0, %s50
      %s52 = sphi 0, %s50
      %s53 = sphi 0, %s52
      %s67 = sphi 0, %s53
      %s71 = sphi 0, %s71
      %s73 = sphi 0, %s71
      %s74 = sphi 0, %s73
      %s88 = sphi 0, %s74
      %s92 = sphi 0, %s92
      %s94 = sphi 0, %s92
      %s95 = sphi 0, %s94
      %s109 = sphi 0, %s95
      %s113 = sphi 0, %s113
      %s115 = sphi 0, %s113
      %s116 = sphi 0, %s115
      %s130 = sphi 0, %s116
      %s134 = sphi 0, %s134
      %s136 = sphi 0, %s134
      %s137 = sphi 0, %s136
      %s151 = sphi 0, %s137
      %s157 = sphi 0, %s159
      %s160 = sphi 0, %s157
      %s161 = sphi 0, %s160
      %s177 = sphi 0, %s161
    $region4: #{tpu_custom_call.1} parent=1 // loop_header_branch
      %19 = sbr.rel (%p17) target = $region8
    $region5: #{tpu_custom_call.1} parent=1 // loop_body
      %s21 = ssub.s32 %s16, 1
      %s22 = ssub.s32 %s16, 2
      %s23 = sadd.s32 %s16, 1
      %s24 = ssub.s32 %s16, %s23
      %p25 = scmp.eq.s32.totalorder %s24, 0
      %s27 = sadd.s32 %s26, 1
      %s28 = scalar_select %p25, %s26, %s27
      %p31 = pneg %p25
      %p32 = scmp.eq.s32.totalorder %s16, 1
      %p33 = por %p31, %p32
      %p34 = scmp.ne.s32.totalorder %s26, %s29
      %p35 = scmp.eq.s32.totalorder %s16, 0
      %p36 = por %p34, %p35
      %p37 = scmp.ne.s32.totalorder %s26, %s29
      %p38 = scmp.eq.s32.totalorder %s21, 1
      %p39 = por %p37, %p38
      %p40 = scmp.ne.s32.totalorder %s29, %s30
      %p41 = scmp.eq.s32.totalorder %s21, 0
      %p42 = por %p40, %p41
      %p43 = scmp.ne.s32.totalorder %s29, %s30
      %p44 = scmp.eq.s32.totalorder %s22, 1
      %p45 = por %p43, %p44
      %p47 = scmp.ne.s32.totalorder %s30, %s46
      %p48 = scmp.eq.s32.totalorder %s22, 0
      %p49 = por %p47, %p48
      %s51 = sadd.s32 %s50, 1
      %p54 = scmp.eq.s32.totalorder %s16, 1
      %p55 = scmp.ne.s32.totalorder %s50, %s52
      %p56 = scmp.eq.s32.totalorder %s16, 0
      %p57 = por %p55, %p56
      %p58 = scmp.ne.s32.totalorder %s50, %s52
      %p59 = scmp.eq.s32.totalorder %s21, 1
      %p60 = por %p58, %p59
      %p61 = scmp.ne.s32.totalorder %s52, %s53
      %p62 = scmp.eq.s32.totalorder %s21, 0
      %p63 = por %p61, %p62
      %p64 = scmp.ne.s32.totalorder %s52, %s53
      %p65 = scmp.eq.s32.totalorder %s22, 1
      %p66 = por %p64, %p65
      %p68 = scmp.ne.s32.totalorder %s53, %s67
      %p69 = scmp.eq.s32.totalorder %s22, 0
      %p70 = por %p68, %p69
      %s72 = sadd.s32 %s71, 1
      %p75 = scmp.eq.s32.totalorder %s16, 1
      %p76 = scmp.ne.s32.totalorder %s71, %s73
      %p77 = scmp.eq.s32.totalorder %s16, 0
      %p78 = por %p76, %p77
      %p79 = scmp.ne.s32.totalorder %s71, %s73
      %p80 = scmp.eq.s32.totalorder %s21, 1
      %p81 = por %p79, %p80
      %p82 = scmp.ne.s32.totalorder %s73, %s74
      %p83 = scmp.eq.s32.totalorder %s21, 0
      %p84 = por %p82, %p83
      %p85 = scmp.ne.s32.totalorder %s73, %s74
      %p86 = scmp.eq.s32.totalorder %s22, 1
      %p87 = por %p85, %p86
      %p89 = scmp.ne.s32.totalorder %s74, %s88
      %p90 = scmp.eq.s32.totalorder %s22, 0
      %p91 = por %p89, %p90
      %s93 = sadd.s32 %s92, 1
      %p96 = scmp.eq.s32.totalorder %s16, 1
      %p97 = scmp.ne.s32.totalorder %s92, %s94
      %p98 = scmp.eq.s32.totalorder %s16, 0
      %p99 = por %p97, %p98
      %p100 = scmp.ne.s32.totalorder %s92, %s94
      %p101 = scmp.eq.s32.totalorder %s21, 1
      %p102 = por %p100, %p101
      %p103 = scmp.ne.s32.totalorder %s94, %s95
      %p104 = scmp.eq.s32.totalorder %s21, 0
      %p105 = por %p103, %p104
      %p106 = scmp.ne.s32.totalorder %s94, %s95
      %p107 = scmp.eq.s32.totalorder %s22, 1
      %p108 = por %p106, %p107
      %p110 = scmp.ne.s32.totalorder %s95, %s109
      %p111 = scmp.eq.s32.totalorder %s22, 0
      %p112 = por %p110, %p111
      %s114 = sadd.s32 %s113, 1
      %p117 = scmp.eq.s32.totalorder %s16, 1
      %p118 = scmp.ne.s32.totalorder %s113, %s115
      %p119 = scmp.eq.s32.totalorder %s16, 0
      %p120 = por %p118, %p119
      %p121 = scmp.ne.s32.totalorder %s113, %s115
      %p122 = scmp.eq.s32.totalorder %s21, 1
      %p123 = por %p121, %p122
      %p124 = scmp.ne.s32.totalorder %s115, %s116
      %p125 = scmp.eq.s32.totalorder %s21, 0
      %p126 = por %p124, %p125
      %p127 = scmp.ne.s32.totalorder %s115, %s116
      %p128 = scmp.eq.s32.totalorder %s22, 1
      %p129 = por %p127, %p128
      %p131 = scmp.ne.s32.totalorder %s116, %s130
      %p132 = scmp.eq.s32.totalorder %s22, 0
      %p133 = por %p131, %p132
      %s135 = sadd.s32 %s134, 1
      %p138 = scmp.eq.s32.totalorder %s16, 1
      %p139 = scmp.ne.s32.totalorder %s134, %s136
      %p140 = scmp.eq.s32.totalorder %s16, 0
      %p141 = por %p139, %p140
      %p142 = scmp.ne.s32.totalorder %s134, %s136
      %p143 = scmp.eq.s32.totalorder %s21, 1
      %p144 = por %p142, %p143
      %p145 = scmp.ne.s32.totalorder %s136, %s137
      %p146 = scmp.eq.s32.totalorder %s21, 0
      %p147 = por %p145, %p146
      %p148 = scmp.ne.s32.totalorder %s136, %s137
      %p149 = scmp.eq.s32.totalorder %s22, 1
      %p150 = por %p148, %p149
      %p152 = scmp.ne.s32.totalorder %s137, %s151
      %p153 = scmp.eq.s32.totalorder %s22, 0
      %p154 = por %p152, %p153
      %s155 = ssub.s32 %s16, %s23
      %p156 = scmp.eq.s32.totalorder %s155, 0
      %s158 = sadd.s32 %s157, 1
      %s159 = scalar_select %p156, %s157, %s158
      %p162 = pneg %p156
      %p163 = scmp.eq.s32.totalorder %s16, 1
      %p164 = por %p162, %p163
      %p165 = scmp.ne.s32.totalorder %s157, %s160
      %p166 = scmp.eq.s32.totalorder %s16, 0
      %p167 = por %p165, %p166
      %p168 = scmp.ne.s32.totalorder %s157, %s160
      %p169 = scmp.eq.s32.totalorder %s21, 1
      %p170 = por %p168, %p169
      %p171 = scmp.ne.s32.totalorder %s160, %s161
      %p172 = scmp.eq.s32.totalorder %s21, 0
      %p173 = por %p171, %p172
      %p174 = scmp.ne.s32.totalorder %s160, %s161
      %p175 = scmp.eq.s32.totalorder %s22, 1
      %p176 = por %p174, %p175
      %p178 = scmp.ne.s32.totalorder %s161, %s177
      %p179 = scmp.eq.s32.totalorder %s22, 0
      %p180 = por %p178, %p179
      %p181 = scmp.le.s32.totalorder 1, %s16
      %p182 = scmp.lt.s32.totalorder %s16, 3
      %p183 = pnand %p181, %p182
      %p184 = pneg %p183
      // Predicated region
      $region9: #{tpu_custom_call.1} parent=5 // pred_check
        _
      $region10: #{tpu_custom_call.1} parent=5 // pred_check_branch
        %186 = sbr.rel (%p183) target = $region12
      $region11: #{tpu_custom_call.1} parent=5 // pred_region
        %s187 = ssub.s32 %s16, 1
        // Predicated region
        $region13: #{tpu_custom_call.1} parent=11 // pred_check
          %p188 = pneg %p63
        $region14: #{tpu_custom_call.1} parent=11 // pred_check_branch
          %190 = sbr.rel (%p188) target = $region16
        $region15: #{tpu_custom_call.1} parent=11 // pred_region
          _
        $region16: #{tpu_custom_call.1} parent=11 // pred_fallthru
          _
        // Predicated region
        $region17: #{tpu_custom_call.1} parent=11 // pred_check
          %p191 = pneg %p84
        $region18: #{tpu_custom_call.1} parent=11 // pred_check_branch
          %193 = sbr.rel (%p191) target = $region20
        $region19: #{tpu_custom_call.1} parent=11 // pred_region
          _
        $region20: #{tpu_custom_call.1} parent=11 // pred_fallthru
          _
        // Predicated region
        $region21: #{tpu_custom_call.1} parent=11 // pred_check
          %p194 = pneg %p105
        $region22: #{tpu_custom_call.1} parent=11 // pred_check_branch
          %196 = sbr.rel (%p194) target = $region24
        $region23: #{tpu_custom_call.1} parent=11 // pred_region
          _
        $region24: #{tpu_custom_call.1} parent=11 // pred_fallthru
          _
        // Predicated region
        $region25: #{tpu_custom_call.1} parent=11 // pred_check
          %p197 = pneg %p126
        $region26: #{tpu_custom_call.1} parent=11 // pred_check_branch
          %199 = sbr.rel (%p197) target = $region28
        $region27: #{tpu_custom_call.1} parent=11 // pred_region
          _
        $region28: #{tpu_custom_call.1} parent=11 // pred_fallthru
          _
        // Predicated region
        $region29: #{tpu_custom_call.1} parent=11 // pred_check
          %p200 = pneg %p147
        $region30: #{tpu_custom_call.1} parent=11 // pred_check_branch
          %202 = sbr.rel (%p200) target = $region32
        $region31: #{tpu_custom_call.1} parent=11 // pred_region
          _
        $region32: #{tpu_custom_call.1} parent=11 // pred_fallthru
          _
      $region12: #{tpu_custom_call.1} parent=5 // pred_fallthru
        _
      %p203 = scmp.lt.s32.totalorder %s16, 2
      // Predicated region
      $region33: #{tpu_custom_call.1} parent=5 // pred_check
        %p204 = pneg %p203
      $region34: #{tpu_custom_call.1} parent=5 // pred_check_branch
        %206 = sbr.rel (%p204) target = $region36
      $region35: #{tpu_custom_call.1} parent=5 // pred_region
        // Predicated region
        $region37: #{tpu_custom_call.1} parent=35 // pred_check
          %p207 = pneg %p36
        $region38: #{tpu_custom_call.1} parent=35 // pred_check_branch
          %209 = sbr.rel (%p207) target = $region40
        $region39: #{tpu_custom_call.1} parent=35 // pred_region
          %p210 = scmp.lt.s32.totalorder %s16, 1
          %s211 = scalar_select %p210, %s16, 1
          %s212 = smul.addr %s211, 8
          %s213 = smul.addr %s212, 8
          %s214 = scalar_lea.vmem %s0, %s213
        $region40: #{tpu_custom_call.1} parent=35 // pred_fallthru
          _
      $region36: #{tpu_custom_call.1} parent=5 // pred_fallthru
        _
      %p215 = scmp.le.s32.totalorder 1, %s16
      %p216 = scmp.lt.s32.totalorder %s16, 3
      %p217 = pnand %p215, %p216
      %p218 = pneg %p217
      // Predicated region
      $region41: #{tpu_custom_call.1} parent=5 // pred_check
        _
      $region42: #{tpu_custom_call.1} parent=5 // pred_check_branch
        %220 = sbr.rel (%p217) target = $region44
      $region43: #{tpu_custom_call.1} parent=5 // pred_region
        %s221 = ssub.s32 %s16, 1
        %p222 = scmp.lt.s32.totalorder %s21, 1
        %s223 = scalar_select %p222, %s21, 1
        %s224 = smul.addr %s223, 8
        %s225 = smul.addr %s224, 8
        %s226 = scalar_lea.vmem %s0, %s225
        %p227 = pneg %p42
        %p228 = pneg %p39
        %p229 = pneg %p63
        %p230 = pneg %p60
        %p231 = pneg %p84
        %p232 = pneg %p81
        %p233 = pneg %p105
        %p234 = pneg %p102
        %p235 = pneg %p126
        %p236 = pneg %p123
        %p237 = pneg %p147
        %p238 = pneg %p144
        %p239 = pneg %p173
        %p240 = pneg %p170
        %s241 = sand.u32 %s160, 1
        %s242 = scalar_lea.sflag [#allocation5], %s241
        %s243 = sand.u32 %s160, 1
        %s244 = smul.addr %s243, 16
        %s245 = scalar_lea.vmem [#allocation4], %s244
        %p246 = scmp.lt.s32.totalorder %s21, 1
        %s247 = scalar_select %p246, %s21, 1
        %s248 = smul.addr %s247, 8
        %s249 = smul.addr %s248, 8
        %s250 = scalar_lea.vmem %s0, %s249
        %v251 = vld [vmem:[%s250] sm:$0xff]
        %v252 = vld [vmem:[%s250 + $0x8] sm:$0xff]
        %v253 = vld [vmem:[%s250 + $0x10] sm:$0xff]
        %v254 = vld [vmem:[%s250 + $0x18] sm:$0xff]
        %v255 = vld [vmem:[%s250 + $0x20] sm:$0xff]
        %v256 = vld [vmem:[%s250 + $0x28] sm:$0xff]
        %v257 = vld [vmem:[%s250 + $0x30] sm:$0xff]
        %v258 = vld [vmem:[%s250 + $0x38] sm:$0xff]
        %v259 = vld [vmem:[%s1] sm:$0xff]
        %vm260 = vcmask 64512
        %v262 = vsel %vm260, %v251, 0
        %v265 = vsel %vm260, %v252, 0
        %v268 = vsel %vm260, %v253, 0
        %v271 = vsel %vm260, %v254, 0
        %v274 = vsel %vm260, %v255, 0
        %v277 = vsel %vm260, %v256, 0
        %v280 = vsel %vm260, %v257, 0
        %v283 = vsel %vm260, %v258, 0
        %285 = vmatprep.subr.mxu0 0.0
        %286 = vmatpush1.msra.mxu0 %v259
        %287 = vmatprep.subr.mxu0 0.0
        %288 = vmatpush1.msra.mxu0 0.0
        %289 = vmatprep.subr.mxu0 0.0
        %290 = vmatpush1.msra.mxu0 0.0
        %291 = vmatprep.subr.mxu0 0.0
        %292 = vmatpush1.msra.mxu0 0.0
        %293 = vmatprep.subr.mxu0 0.0
        %294 = vmatpush1.msra.mxu0 0.0
        %295 = vmatprep.subr.mxu0 0.0
        %296 = vmatpush1.msra.mxu0 0.0
        %297 = vmatprep.subr.mxu0 0.0
        %298 = vmatpush1.msra.mxu0 0.0
        %299 = vmatprep.subr.mxu0 0.0
        %300 = vmatpush1.msra.mxu0 0.0
        %301 = vmatprep.subr.mxu0 0.0
        %302 = vmatpush1.msra.mxu0 0.0
        %303 = vmatprep.subr.mxu0 0.0
        %304 = vmatpush1.msra.mxu0 0.0
        %305 = vmatprep.subr.mxu0 0.0
        %306 = vmatpush1.msra.mxu0 0.0
        %307 = vmatprep.subr.mxu0 0.0
        %308 = vmatpush1.msra.mxu0 0.0
        %309 = vmatprep.subr.mxu0 0.0
        %310 = vmatpush1.msra.mxu0 0.0
        %311 = vmatprep.subr.mxu0 0.0
        %312 = vmatpush1.msra.mxu0 0.0
        %313 = vmatprep.subr.mxu0 0.0
        %314 = vmatpush1.msra.mxu0 0.0
        %315 = vmatprep.subr.mxu0 0.0
        %316 = vmatpush1.msra.mxu0 0.0
        %317 = vmatprep.subr.mxu0 0.0
        %318 = vmatpush1.msra.mxu0 0.0
        %319 = vmatprep.subr.mxu0 0.0
        %320 = vmatpush1.msra.mxu0 0.0
        %321 = vmatprep.subr.mxu0 0.0
        %322 = vmatpush1.msra.mxu0 0.0
        %323 = vmatprep.subr.mxu0 0.0
        %324 = vmatpush1.msra.mxu0 0.0
        %325 = vmatprep.subr.mxu0 0.0
        %326 = vmatpush1.msra.mxu0 0.0
        %327 = vmatprep.subr.mxu0 0.0
        %328 = vmatpush1.msra.mxu0 0.0
        %329 = vmatprep.subr.mxu0 0.0
        %330 = vmatpush1.msra.mxu0 0.0
        %331 = vmatprep.subr.mxu0 0.0
        %332 = vmatpush1.msra.mxu0 0.0
        %333 = vmatprep.subr.mxu0 0.0
        %334 = vmatpush1.msra.mxu0 0.0
        %335 = vmatprep.subr.mxu0 0.0
        %336 = vmatpush1.msra.mxu0 0.0
        %337 = vmatprep.subr.mxu0 0.0
        %338 = vmatpush1.msra.mxu0 0.0
        %339 = vmatprep.subr.mxu0 0.0
        %340 = vmatpush1.msra.mxu0 0.0
        %341 = vmatprep.subr.mxu0 0.0
        %342 = vmatpush1.msra.mxu0 0.0
        %343 = vmatprep.subr.mxu0 0.0
        %344 = vmatpush1.msra.mxu0 0.0
        %345 = vmatprep.subr.mxu0 0.0
        %346 = vmatpush1.msra.mxu0 0.0
        %347 = vmatprep.subr.mxu0 0.0
        %348 = vmatpush1.msra.mxu0 0.0
        %349 = vmatprep.mubr.f32.mxu0 0.0
        %350 = vmatmul.mubr.f32.gmra.mrb[0].mxu0 %v262
        %v351 = vpop.f32.mrb[0].mxu0
        %v352 = vadd.f32 0.0, %v351
        %v353 = vpop.f32.mrb[0].mxu0
        %354 = vmatprep.mubr.f32.mxu0 0.0
        %355 = vmatmul.mubr.f32.gmra.mrb[0].mxu0 %v265
        %v356 = vpop.f32.mrb[0].mxu0
        %v357 = vadd.f32 0.0, %v356
        %v358 = vpop.f32.mrb[0].mxu0
        %359 = vmatprep.mubr.f32.mxu0 0.0
        %360 = vmatmul.mubr.f32.gmra.mrb[0].mxu0 %v268
        %v361 = vpop.f32.mrb[0].mxu0
        %v362 = vadd.f32 0.0, %v361
        %v363 = vpop.f32.mrb[0].mxu0
        %364 = vmatprep.mubr.f32.mxu0 0.0
        %365 = vmatmul.mubr.f32.gmra.mrb[0].mxu0 %v271
        %v366 = vpop.f32.mrb[0].mxu0
        %v367 = vadd.f32 0.0, %v366
        %v368 = vpop.f32.mrb[0].mxu0
        %369 = vmatprep.mubr.f32.mxu0 0.0
        %370 = vmatmul.mubr.f32.gmra.mrb[0].mxu0 %v274
        %v371 = vpop.f32.mrb[0].mxu0
        %v372 = vadd.f32 0.0, %v371
        %v373 = vpop.f32.mrb[0].mxu0
        %374 = vmatprep.mubr.f32.mxu0 0.0
        %375 = vmatmul.mubr.f32.gmra.mrb[0].mxu0 %v277
        %v376 = vpop.f32.mrb[0].mxu0
        %v377 = vadd.f32 0.0, %v376
        %v378 = vpop.f32.mrb[0].mxu0
        %379 = vmatprep.mubr.f32.mxu0 0.0
        %380 = vmatmul.mubr.f32.gmra.mrb[0].mxu0 %v280
        %v381 = vpop.f32.mrb[0].mxu0
        %v382 = vadd.f32 0.0, %v381
        %v383 = vpop.f32.mrb[0].mxu0
        %384 = vmatprep.mubr.f32.mxu0 0.0
        %385 = vmatmul.mubr.f32.gmra.mrb[0].mxu0 %v283
        %v386 = vpop.f32.mrb[0].mxu0
        %v387 = vadd.f32 0.0, %v386
        %v388 = vpop.f32.mrb[0].mxu0
        %389 = vdwg.mxu0
        %390 = vst [vmem:[#allocation2] sm:$0xff] 0.0
        %391 = vst [vmem:[#allocation2 + $0x18] sm:$0xff] 0.0
        %v400 = vrot.slane %v357, 7
        %vm401 = vcmask 1041409
        %v402 = vsel %vm401, %v400, %v352
        %v403 = vrot.slane %v362, 6
        %vm404 = vcmask 1042434
        %v405 = vsel %vm404, %v403, %v402
        %v406 = vrot.slane %v367, 5
        %vm407 = vcmask 1043459
        %v408 = vsel %vm407, %v406, %v405
        %v409 = vrot.slane %v372, 4
        %vm410 = vcmask 1044484
        %v411 = vsel %vm410, %v409, %v408
        %v412 = vrot.slane %v377, 3
        %vm413 = vcmask 1045509
        %v414 = vsel %vm413, %v412, %v411
        %v415 = vrot.slane %v382, 2
        %vm416 = vcmask 1046534
        %v417 = vsel %vm416, %v415, %v414
        %v418 = vrot.slane %v387, 1
        %vm419 = vcmask 1047559
        %v420 = vsel %vm419, %v418, %v417
        %vm422 = vcmask 130048
        %423 = vst.msk [vmem:[#allocation2 + $0x8] sm:$0xff] %vm422, %v420
        %v424 = vmul.f32 %v352, 0.53333336
        %v425 = vmul.f32 %v357, 0.53333336
        %v426 = vmul.f32 %v362, 0.53333336
        %v427 = vmul.f32 %v367, 0.53333336
        %v428 = vmul.f32 %v372, 0.53333336
        %v429 = vmul.f32 %v377, 0.53333336
        %v430 = vmul.f32 %v382, 0.53333336
        %v431 = vmul.f32 %v387, 0.53333336
        %v432 = vmul.f32 %v352, 0.46666667
        %v433 = vmul.f32 %v357, 0.46666667
        %v434 = vmul.f32 %v362, 0.46666667
        %v435 = vmul.f32 %v367, 0.46666667
        %v436 = vmul.f32 %v372, 0.46666667
        %v437 = vmul.f32 %v377, 0.46666667
        %v438 = vmul.f32 %v382, 0.46666667
        %v439 = vmul.f32 %v387, 0.46666667
        %v448 = vrot.slane %v432, 1
        %v449 = vrot.slane %v433, 1
        %v450 = vrot.slane %v434, 1
        %v451 = vrot.slane %v435, 1
        %v452 = vrot.slane %v436, 1
        %v453 = vrot.slane %v437, 1
        %v454 = vrot.slane %v438, 1
        %v455 = vrot.slane %v439, 1
        %v464 = vadd.f32 %v424, %v448
        %v465 = vadd.f32 %v425, %v449
        %v466 = vadd.f32 %v426, %v450
        %v467 = vadd.f32 %v427, %v451
        %v468 = vadd.f32 %v428, %v452
        %v469 = vadd.f32 %v429, %v453
        %v470 = vadd.f32 %v430, %v454
        %v471 = vadd.f32 %v431, %v455
        %v480 = vrot.slane %v465, 7
        %v481 = vsel %vm401, %v480, %v464
        %v482 = vrot.slane %v466, 6
        %v483 = vsel %vm404, %v482, %v481
        %v484 = vrot.slane %v467, 5
        %v485 = vsel %vm407, %v484, %v483
        %v486 = vrot.slane %v468, 4
        %v487 = vsel %vm410, %v486, %v485
        %v488 = vrot.slane %v469, 3
        %v489 = vsel %vm413, %v488, %v487
        %v490 = vrot.slane %v470, 2
        %v491 = vsel %vm416, %v490, %v489
        %v492 = vrot.slane %v471, 1
        %v493 = vsel %vm419, %v492, %v491
        %494 = vrot.lane.b32.xlu0 %v493, 16
        %v495 = vpop.permute.xlu0 %494
        %vm497 = vcmask 261248
        %498 = vst.msk [vmem:[#allocation2 + $0x8] sm:$0xff] %vm497, %v495
        %v499 = vmul.f32 %v352, 0.06666667
        %v500 = vmul.f32 %v357, 0.06666667
        %v501 = vmul.f32 %v362, 0.06666667
        %v502 = vmul.f32 %v367, 0.06666667
        %v503 = vmul.f32 %v372, 0.06666667
        %v504 = vmul.f32 %v377, 0.06666667
        %v505 = vmul.f32 %v382, 0.06666667
        %v506 = vmul.f32 %v387, 0.06666667
        %v507 = vmul.f32 %v352, 0.93333334
        %v508 = vmul.f32 %v357, 0.93333334
        %v509 = vmul.f32 %v362, 0.93333334
        %v510 = vmul.f32 %v367, 0.93333334
        %v511 = vmul.f32 %v372, 0.93333334
        %v512 = vmul.f32 %v377, 0.93333334
        %v513 = vmul.f32 %v382, 0.93333334
        %v514 = vmul.f32 %v387, 0.93333334
        %v523 = vrot.slane %v507, 1
        %v524 = vrot.slane %v508, 1
        %v525 = vrot.slane %v509, 1
        %v526 = vrot.slane %v510, 1
        %v527 = vrot.slane %v511, 1
        %v528 = vrot.slane %v512, 1
        %v529 = vrot.slane %v513, 1
        %v530 = vrot.slane %v514, 1
        %v539 = vadd.f32 %v499, %v523
        %v540 = vadd.f32 %v500, %v524
        %v541 = vadd.f32 %v501, %v525
        %v542 = vadd.f32 %v502, %v526
        %v543 = vadd.f32 %v503, %v527
        %v544 = vadd.f32 %v504, %v528
        %v545 = vadd.f32 %v505, %v529
        %v546 = vadd.f32 %v506, %v530
        %v555 = vrot.slane %v540, 7
        %v556 = vsel %vm401, %v555, %v539
        %v557 = vrot.slane %v541, 6
        %v558 = vsel %vm404, %v557, %v556
        %v559 = vrot.slane %v542, 5
        %v560 = vsel %vm407, %v559, %v558
        %v561 = vrot.slane %v543, 4
        %v562 = vsel %vm410, %v561, %v560
        %v563 = vrot.slane %v544, 3
        %v564 = vsel %vm413, %v563, %v562
        %v565 = vrot.slane %v545, 2
        %v566 = vsel %vm416, %v565, %v564
        %v567 = vrot.slane %v546, 1
        %v568 = vsel %vm419, %v567, %v566
        %569 = vrot.lane.b32.xlu0 %v568, 32
        %v570 = vpop.permute.xlu0 %569
        %vm572 = vcmask 392448
        %573 = vst.msk [vmem:[#allocation2 + $0x8] sm:$0xff] %vm572, %v570
        %v574 = vmul.f32 %v352, 0.6
        %v575 = vmul.f32 %v357, 0.6
        %v576 = vmul.f32 %v362, 0.6
        %v577 = vmul.f32 %v367, 0.6
        %v578 = vmul.f32 %v372, 0.6
        %v579 = vmul.f32 %v377, 0.6
        %v580 = vmul.f32 %v382, 0.6
        %v581 = vmul.f32 %v387, 0.6
        %v582 = vmul.f32 %v352, 0.4
        %v583 = vmul.f32 %v357, 0.4
        %v584 = vmul.f32 %v362, 0.4
        %v585 = vmul.f32 %v367, 0.4
        %v586 = vmul.f32 %v372, 0.4
        %v587 = vmul.f32 %v377, 0.4
        %v588 = vmul.f32 %v382, 0.4
        %v589 = vmul.f32 %v387, 0.4
        %v598 = vrot.slane %v582, 1
        %v599 = vrot.slane %v583, 1
        %v600 = vrot.slane %v584, 1
        %v601 = vrot.slane %v585, 1
        %v602 = vrot.slane %v586, 1
        %v603 = vrot.slane %v587, 1
        %v604 = vrot.slane %v588, 1
        %v605 = vrot.slane %v589, 1
        %v614 = vadd.f32 %v574, %v598
        %v615 = vadd.f32 %v575, %v599
        %v616 = vadd.f32 %v576, %v600
        %v617 = vadd.f32 %v577, %v601
        %v618 = vadd.f32 %v578, %v602
        %v619 = vadd.f32 %v579, %v603
        %v620 = vadd.f32 %v580, %v604
        %v621 = vadd.f32 %v581, %v605
        %v630 = vrot.slane %v614, 1
        %v631 = vsel %vm401, %v615, %v630
        %v632 = vrot.slane %v616, 7
        %v633 = vsel %vm404, %v632, %v631
        %v634 = vrot.slane %v617, 6
        %v635 = vsel %vm407, %v634, %v633
        %v636 = vrot.slane %v618, 5
        %v637 = vsel %vm410, %v636, %v635
        %v638 = vrot.slane %v619, 4
        %v639 = vsel %vm413, %v638, %v637
        %v640 = vrot.slane %v620, 3
        %v641 = vsel %vm416, %v640, %v639
        %v642 = vrot.slane %v621, 2
        %v643 = vsel %vm419, %v642, %v641
        %644 = vrot.lane.b32.xlu0 %v643, 48
        %v645 = vpop.permute.xlu0 %644
        %vm647 = vcmask 523648
        %648 = vst.msk [vmem:[#allocation2 + $0x8] sm:$0xff] %vm647, %v645
        %v649 = vmul.f32 %v352, 0.13333334
        %v650 = vmul.f32 %v357, 0.13333334
        %v651 = vmul.f32 %v362, 0.13333334
        %v652 = vmul.f32 %v367, 0.13333334
        %v653 = vmul.f32 %v372, 0.13333334
        %v654 = vmul.f32 %v377, 0.13333334
        %v655 = vmul.f32 %v382, 0.13333334
        %v656 = vmul.f32 %v387, 0.13333334
        %v657 = vmul.f32 %v352, 0.8666667
        %v658 = vmul.f32 %v357, 0.8666667
        %v659 = vmul.f32 %v362, 0.8666667
        %v660 = vmul.f32 %v367, 0.8666667
        %v661 = vmul.f32 %v372, 0.8666667
        %v662 = vmul.f32 %v377, 0.8666667
        %v663 = vmul.f32 %v382, 0.8666667
        %v664 = vmul.f32 %v387, 0.8666667
        %v673 = vrot.slane %v657, 1
        %v674 = vrot.slane %v658, 1
        %v675 = vrot.slane %v659, 1
        %v676 = vrot.slane %v660, 1
        %v677 = vrot.slane %v661, 1
        %v678 = vrot.slane %v662, 1
        %v679 = vrot.slane %v663, 1
        %v680 = vrot.slane %v664, 1
        %v689 = vadd.f32 %v649, %v673
        %v690 = vadd.f32 %v650, %v674
        %v691 = vadd.f32 %v651, %v675
        %v692 = vadd.f32 %v652, %v676
        %v693 = vadd.f32 %v653, %v677
        %v694 = vadd.f32 %v654, %v678
        %v695 = vadd.f32 %v655, %v679
        %v696 = vadd.f32 %v656, %v680
        %v705 = vrot.slane %v689, 1
        %v706 = vsel %vm401, %v690, %v705
        %v707 = vrot.slane %v691, 7
        %v708 = vsel %vm404, %v707, %v706
        %v709 = vrot.slane %v692, 6
        %v710 = vsel %vm407, %v709, %v708
        %v711 = vrot.slane %v693, 5
        %v712 = vsel %vm410, %v711, %v710
        %v713 = vrot.slane %v694, 4
        %v714 = vsel %vm413, %v713, %v712
        %v715 = vrot.slane %v695, 3
        %v716 = vsel %vm416, %v715, %v714
        %v717 = vrot.slane %v696, 2
        %v718 = vsel %vm419, %v717, %v716
        %719 = vrot.lane.b32.xlu0 %v718, 64
        %v720 = vpop.permute.xlu0 %719
        %vm722 = vcmask 654848
        %723 = vst.msk [vmem:[#allocation2 + $0x8] sm:$0xff] %vm722, %v720
        %v724 = vmul.f32 %v352, 0.6666667
        %v725 = vmul.f32 %v357, 0.6666667
        %v726 = vmul.f32 %v362, 0.6666667
        %v727 = vmul.f32 %v367, 0.6666667
        %v728 = vmul.f32 %v372, 0.6666667
        %v729 = vmul.f32 %v377, 0.6666667
        %v730 = vmul.f32 %v382, 0.6666667
        %v731 = vmul.f32 %v387, 0.6666667
        %v732 = vmul.f32 %v352, 0.33333334
        %v733 = vmul.f32 %v357, 0.33333334
        %v734 = vmul.f32 %v362, 0.33333334
        %v735 = vmul.f32 %v367, 0.33333334
        %v736 = vmul.f32 %v372, 0.33333334
        %v737 = vmul.f32 %v377, 0.33333334
        %v738 = vmul.f32 %v382, 0.33333334
        %v739 = vmul.f32 %v387, 0.33333334
        %v748 = vrot.slane %v732, 1
        %v749 = vrot.slane %v733, 1
        %v750 = vrot.slane %v734, 1
        %v751 = vrot.slane %v735, 1
        %v752 = vrot.slane %v736, 1
        %v753 = vrot.slane %v737, 1
        %v754 = vrot.slane %v738, 1
        %v755 = vrot.slane %v739, 1
        %v764 = vadd.f32 %v724, %v748
        %v765 = vadd.f32 %v725, %v749
        %v766 = vadd.f32 %v726, %v750
        %v767 = vadd.f32 %v727, %v751
        %v768 = vadd.f32 %v728, %v752
        %v769 = vadd.f32 %v729, %v753
        %v770 = vadd.f32 %v730, %v754
        %v771 = vadd.f32 %v731, %v755
        %v780 = vrot.slane %v764, 2
        %v781 = vrot.slane %v765, 1
        %v782 = vsel %vm401, %v781, %v780
        %v783 = vsel %vm404, %v766, %v782
        %v784 = vrot.slane %v767, 7
        %v785 = vsel %vm407, %v784, %v783
        %v786 = vrot.slane %v768, 6
        %v787 = vsel %vm410, %v786, %v785
        %v788 = vrot.slane %v769, 5
        %v789 = vsel %vm413, %v788, %v787
        %v790 = vrot.slane %v770, 4
        %v791 = vsel %vm416, %v790, %v789
        %v792 = vrot.slane %v771, 3
        %v793 = vsel %vm419, %v792, %v791
        %794 = vrot.lane.b32.xlu0 %v793, 80
        %v795 = vpop.permute.xlu0 %794
        %vm797 = vcmask 786048
        %798 = vst.msk [vmem:[#allocation2 + $0x8] sm:$0xff] %vm797, %v795
        %v799 = vmul.f32 %v352, 0.2
        %v800 = vmul.f32 %v357, 0.2
        %v801 = vmul.f32 %v362, 0.2
        %v802 = vmul.f32 %v367, 0.2
        %v803 = vmul.f32 %v372, 0.2
        %v804 = vmul.f32 %v377, 0.2
        %v805 = vmul.f32 %v382, 0.2
        %v806 = vmul.f32 %v387, 0.2
        %v807 = vmul.f32 %v352, 0.8
        %v808 = vmul.f32 %v357, 0.8
        %v809 = vmul.f32 %v362, 0.8
        %v810 = vmul.f32 %v367, 0.8
        %v811 = vmul.f32 %v372, 0.8
        %v812 = vmul.f32 %v377, 0.8
        %v813 = vmul.f32 %v382, 0.8
        %v814 = vmul.f32 %v387, 0.8
        %v823 = vrot.slane %v807, 1
        %v824 = vrot.slane %v808, 1
        %v825 = vrot.slane %v809, 1
        %v826 = vrot.slane %v810, 1
        %v827 = vrot.slane %v811, 1
        %v828 = vrot.slane %v812, 1
        %v829 = vrot.slane %v813, 1
        %v830 = vrot.slane %v814, 1
        %v839 = vadd.f32 %v799, %v823
        %v840 = vadd.f32 %v800, %v824
        %v841 = vadd.f32 %v801, %v825
        %v842 = vadd.f32 %v802, %v826
        %v843 = vadd.f32 %v803, %v827
        %v844 = vadd.f32 %v804, %v828
        %v845 = vadd.f32 %v805, %v829
        %v846 = vadd.f32 %v806, %v830
        %v855 = vrot.slane %v839, 2
        %v856 = vrot.slane %v840, 1
        %v857 = vsel %vm401, %v856, %v855
        %v858 = vsel %vm404, %v841, %v857
        %v859 = vrot.slane %v842, 7
        %v860 = vsel %vm407, %v859, %v858
        %v861 = vrot.slane %v843, 6
        %v862 = vsel %vm410, %v861, %v860
        %v863 = vrot.slane %v844, 5
        %v864 = vsel %vm413, %v863, %v862
        %v865 = vrot.slane %v845, 4
        %v866 = vsel %vm416, %v865, %v864
        %v867 = vrot.slane %v846, 3
        %v868 = vsel %vm419, %v867, %v866
        %869 = vrot.lane.b32.xlu0 %v868, 96
        %v870 = vpop.permute.xlu0 %869
        %vm872 = vcmask 917248
        %873 = vst.msk [vmem:[#allocation2 + $0x8] sm:$0xff] %vm872, %v870
        %v874 = vmul.f32 %v352, 0.73333335
        %v875 = vmul.f32 %v357, 0.73333335
        %v876 = vmul.f32 %v362, 0.73333335
        %v877 = vmul.f32 %v367, 0.73333335
        %v878 = vmul.f32 %v372, 0.73333335
        %v879 = vmul.f32 %v377, 0.73333335
        %v880 = vmul.f32 %v382, 0.73333335
        %v881 = vmul.f32 %v387, 0.73333335
        %v882 = vmul.f32 %v352, 0.26666668
        %v883 = vmul.f32 %v357, 0.26666668
        %v884 = vmul.f32 %v362, 0.26666668
        %v885 = vmul.f32 %v367, 0.26666668
        %v886 = vmul.f32 %v372, 0.26666668
        %v887 = vmul.f32 %v377, 0.26666668
        %v888 = vmul.f32 %v382, 0.26666668
        %v889 = vmul.f32 %v387, 0.26666668
        %v898 = vrot.slane %v882, 1
        %v899 = vrot.slane %v883, 1
        %v900 = vrot.slane %v884, 1
        %v901 = vrot.slane %v885, 1
        %v902 = vrot.slane %v886, 1
        %v903 = vrot.slane %v887, 1
        %v904 = vrot.slane %v888, 1
        %v905 = vrot.slane %v889, 1
        %v914 = vadd.f32 %v874, %v898
        %v915 = vadd.f32 %v875, %v899
        %v916 = vadd.f32 %v876, %v900
        %v917 = vadd.f32 %v877, %v901
        %v918 = vadd.f32 %v878, %v902
        %v919 = vadd.f32 %v879, %v903
        %v920 = vadd.f32 %v880, %v904
        %v921 = vadd.f32 %v881, %v905
        %v930 = vrot.slane %v914, 3
        %v931 = vrot.slane %v915, 2
        %v932 = vsel %vm401, %v931, %v930
        %v933 = vrot.slane %v916, 1
        %v934 = vsel %vm404, %v933, %v932
        %v935 = vsel %vm407, %v917, %v934
        %v936 = vrot.slane %v918, 7
        %v937 = vsel %vm410, %v936, %v935
        %v938 = vrot.slane %v919, 6
        %v939 = vsel %vm413, %v938, %v937
        %v940 = vrot.slane %v920, 5
        %v941 = vsel %vm416, %v940, %v939
        %v942 = vrot.slane %v921, 4
        %v943 = vsel %vm419, %v942, %v941
        %944 = vrot.lane.b32.xlu0 %v943, 112
        %v945 = vpop.permute.xlu0 %944
        %vm947 = vcmask 1048448
        %948 = vst.msk [vmem:[#allocation2 + $0x8] sm:$0xff] %vm947, %v945
        %v957 = vrot.slane %v874, 1
        %v958 = vrot.slane %v875, 1
        %v959 = vrot.slane %v876, 1
        %v960 = vrot.slane %v877, 1
        %v961 = vrot.slane %v878, 1
        %v962 = vrot.slane %v879, 1
        %v963 = vrot.slane %v880, 1
        %v964 = vrot.slane %v881, 1
        %v973 = vadd.f32 %v882, %v957
        %v974 = vadd.f32 %v883, %v958
        %v975 = vadd.f32 %v884, %v959
        %v976 = vadd.f32 %v885, %v960
        %v977 = vadd.f32 %v886, %v961
        %v978 = vadd.f32 %v887, %v962
        %v979 = vadd.f32 %v888, %v963
        %v980 = vadd.f32 %v889, %v964
        %v989 = vrot.slane %v973, 3
        %v990 = vrot.slane %v974, 2
        %v991 = vsel %vm401, %v990, %v989
        %v992 = vrot.slane %v975, 1
        %v993 = vsel %vm404, %v992, %v991
        %v994 = vsel %vm407, %v976, %v993
        %v995 = vrot.slane %v977, 7
        %v996 = vsel %vm410, %v995, %v994
        %v997 = vrot.slane %v978, 6
        %v998 = vsel %vm413, %v997, %v996
        %v999 = vrot.slane %v979, 5
        %v1000 = vsel %vm416, %v999, %v998
        %v1001 = vrot.slane %v980, 4
        %v1002 = vsel %vm419, %v1001, %v1000
        %1004 = vst.msk [vmem:[#allocation2 + $0x10] sm:$0xff] %vm422, %v1002
        %v1013 = vrot.slane %v799, 1
        %v1014 = vrot.slane %v800, 1
        %v1015 = vrot.slane %v801, 1
        %v1016 = vrot.slane %v802, 1
        %v1017 = vrot.slane %v803, 1
        %v1018 = vrot.slane %v804, 1
        %v1019 = vrot.slane %v805, 1
        %v1020 = vrot.slane %v806, 1
        %v1029 = vadd.f32 %v807, %v1013
        %v1030 = vadd.f32 %v808, %v1014
        %v1031 = vadd.f32 %v809, %v1015
        %v1032 = vadd.f32 %v810, %v1016
        %v1033 = vadd.f32 %v811, %v1017
        %v1034 = vadd.f32 %v812, %v1018
        %v1035 = vadd.f32 %v813, %v1019
        %v1036 = vadd.f32 %v814, %v1020
        %v1045 = vrot.slane %v1029, 4
        %v1046 = vrot.slane %v1030, 3
        %v1047 = vsel %vm401, %v1046, %v1045
        %v1048 = vrot.slane %v1031, 2
        %v1049 = vsel %vm404, %v1048, %v1047
        %v1050 = vrot.slane %v1032, 1
        %v1051 = vsel %vm407, %v1050, %v1049
        %v1052 = vsel %vm410, %v1033, %v1051
        %v1053 = vrot.slane %v1034, 7
        %v1054 = vsel %vm413, %v1053, %v1052
        %v1055 = vrot.slane %v1035, 6
        %v1056 = vsel %vm416, %v1055, %v1054
        %v1057 = vrot.slane %v1036, 5
        %v1058 = vsel %vm419, %v1057, %v1056
        %1059 = vrot.lane.b32.xlu0 %v1058, 16
        %v1060 = vpop.permute.xlu0 %1059
        %1062 = vst.msk [vmem:[#allocation2 + $0x10] sm:$0xff] %vm497, %v1060
        %v1071 = vrot.slane %v724, 1
        %v1072 = vrot.slane %v725, 1
        %v1073 = vrot.slane %v726, 1
        %v1074 = vrot.slane %v727, 1
        %v1075 = vrot.slane %v728, 1
        %v1076 = vrot.slane %v729, 1
        %v1077 = vrot.slane %v730, 1
        %v1078 = vrot.slane %v731, 1
        %v1087 = vadd.f32 %v732, %v1071
        %v1088 = vadd.f32 %v733, %v1072
        %v1089 = vadd.f32 %v734, %v1073
        %v1090 = vadd.f32 %v735, %v1074
        %v1091 = vadd.f32 %v736, %v1075
        %v1092 = vadd.f32 %v737, %v1076
        %v1093 = vadd.f32 %v738, %v1077
        %v1094 = vadd.f32 %v739, %v1078
        %v1103 = vrot.slane %v1087, 4
        %v1104 = vrot.slane %v1088, 3
        %v1105 = vsel %vm401, %v1104, %v1103
        %v1106 = vrot.slane %v1089, 2
        %v1107 = vsel %vm404, %v1106, %v1105
        %v1108 = vrot.slane %v1090, 1
        %v1109 = vsel %vm407, %v1108, %v1107
        %v1110 = vsel %vm410, %v1091, %v1109
        %v1111 = vrot.slane %v1092, 7
        %v1112 = vsel %vm413, %v1111, %v1110
        %v1113 = vrot.slane %v1093, 6
        %v1114 = vsel %vm416, %v1113, %v1112
        %v1115 = vrot.slane %v1094, 5
        %v1116 = vsel %vm419, %v1115, %v1114
        %1117 = vrot.lane.b32.xlu0 %v1116, 32
        %v1118 = vpop.permute.xlu0 %1117
        %1120 = vst.msk [vmem:[#allocation2 + $0x10] sm:$0xff] %vm572, %v1118
        %v1129 = vrot.slane %v649, 1
        %v1130 = vrot.slane %v650, 1
        %v1131 = vrot.slane %v651, 1
        %v1132 = vrot.slane %v652, 1
        %v1133 = vrot.slane %v653, 1
        %v1134 = vrot.slane %v654, 1
        %v1135 = vrot.slane %v655, 1
        %v1136 = vrot.slane %v656, 1
        %v1145 = vadd.f32 %v657, %v1129
        %v1146 = vadd.f32 %v658, %v1130
        %v1147 = vadd.f32 %v659, %v1131
        %v1148 = vadd.f32 %v660, %v1132
        %v1149 = vadd.f32 %v661, %v1133
        %v1150 = vadd.f32 %v662, %v1134
        %v1151 = vadd.f32 %v663, %v1135
        %v1152 = vadd.f32 %v664, %v1136
        %v1161 = vrot.slane %v1145, 5
        %v1162 = vrot.slane %v1146, 4
        %v1163 = vsel %vm401, %v1162, %v1161
        %v1164 = vrot.slane %v1147, 3
        %v1165 = vsel %vm404, %v1164, %v1163
        %v1166 = vrot.slane %v1148, 2
        %v1167 = vsel %vm407, %v1166, %v1165
        %v1168 = vrot.slane %v1149, 1
        %v1169 = vsel %vm410, %v1168, %v1167
        %v1170 = vsel %vm413, %v1150, %v1169
        %v1171 = vrot.slane %v1151, 7
        %v1172 = vsel %vm416, %v1171, %v1170
        %v1173 = vrot.slane %v1152, 6
        %v1174 = vsel %vm419, %v1173, %v1172
        %1175 = vrot.lane.b32.xlu0 %v1174, 48
        %v1176 = vpop.permute.xlu0 %1175
        %1178 = vst.msk [vmem:[#allocation2 + $0x10] sm:$0xff] %vm647, %v1176
        %v1187 = vrot.slane %v574, 1
        %v1188 = vrot.slane %v575, 1
        %v1189 = vrot.slane %v576, 1
        %v1190 = vrot.slane %v577, 1
        %v1191 = vrot.slane %v578, 1
        %v1192 = vrot.slane %v579, 1
        %v1193 = vrot.slane %v580, 1
        %v1194 = vrot.slane %v581, 1
        %v1203 = vadd.f32 %v582, %v1187
        %v1204 = vadd.f32 %v583, %v1188
        %v1205 = vadd.f32 %v584, %v1189
        %v1206 = vadd.f32 %v585, %v1190
        %v1207 = vadd.f32 %v586, %v1191
        %v1208 = vadd.f32 %v587, %v1192
        %v1209 = vadd.f32 %v588, %v1193
        %v1210 = vadd.f32 %v589, %v1194
        %v1219 = vrot.slane %v1203, 5
        %v1220 = vrot.slane %v1204, 4
        %v1221 = vsel %vm401, %v1220, %v1219
        %v1222 = vrot.slane %v1205, 3
        %v1223 = vsel %vm404, %v1222, %v1221
        %v1224 = vrot.slane %v1206, 2
        %v1225 = vsel %vm407, %v1224, %v1223
        %v1226 = vrot.slane %v1207, 1
        %v1227 = vsel %vm410, %v1226, %v1225
        %v1228 = vsel %vm413, %v1208, %v1227
        %v1229 = vrot.slane %v1209, 7
        %v1230 = vsel %vm416, %v1229, %v1228
        %v1231 = vrot.slane %v1210, 6
        %v1232 = vsel %vm419, %v1231, %v1230
        %1233 = vrot.lane.b32.xlu0 %v1232, 64
        %v1234 = vpop.permute.xlu0 %1233
        %1236 = vst.msk [vmem:[#allocation2 + $0x10] sm:$0xff] %vm722, %v1234
        %v1245 = vrot.slane %v499, 1
        %v1246 = vrot.slane %v500, 1
        %v1247 = vrot.slane %v501, 1
        %v1248 = vrot.slane %v502, 1
        %v1249 = vrot.slane %v503, 1
        %v1250 = vrot.slane %v504, 1
        %v1251 = vrot.slane %v505, 1
        %v1252 = vrot.slane %v506, 1
        %v1261 = vadd.f32 %v507, %v1245
        %v1262 = vadd.f32 %v508, %v1246
        %v1263 = vadd.f32 %v509, %v1247
        %v1264 = vadd.f32 %v510, %v1248
        %v1265 = vadd.f32 %v511, %v1249
        %v1266 = vadd.f32 %v512, %v1250
        %v1267 = vadd.f32 %v513, %v1251
        %v1268 = vadd.f32 %v514, %v1252
        %v1277 = vrot.slane %v1261, 6
        %v1278 = vrot.slane %v1262, 5
        %v1279 = vsel %vm401, %v1278, %v1277
        %v1280 = vrot.slane %v1263, 4
        %v1281 = vsel %vm404, %v1280, %v1279
        %v1282 = vrot.slane %v1264, 3
        %v1283 = vsel %vm407, %v1282, %v1281
        %v1284 = vrot.slane %v1265, 2
        %v1285 = vsel %vm410, %v1284, %v1283
        %v1286 = vrot.slane %v1266, 1
        %v1287 = vsel %vm413, %v1286, %v1285
        %v1288 = vsel %vm416, %v1267, %v1287
        %v1289 = vrot.slane %v1268, 7
        %v1290 = vsel %vm419, %v1289, %v1288
        %1291 = vrot.lane.b32.xlu0 %v1290, 80
        %v1292 = vpop.permute.xlu0 %1291
        %1294 = vst.msk [vmem:[#allocation2 + $0x10] sm:$0xff] %vm797, %v1292
        %v1303 = vrot.slane %v424, 1
        %v1304 = vrot.slane %v425, 1
        %v1305 = vrot.slane %v426, 1
        %v1306 = vrot.slane %v427, 1
        %v1307 = vrot.slane %v428, 1
        %v1308 = vrot.slane %v429, 1
        %v1309 = vrot.slane %v430, 1
        %v1310 = vrot.slane %v431, 1
        %v1319 = vadd.f32 %v432, %v1303
        %v1320 = vadd.f32 %v433, %v1304
        %v1321 = vadd.f32 %v434, %v1305
        %v1322 = vadd.f32 %v435, %v1306
        %v1323 = vadd.f32 %v436, %v1307
        %v1324 = vadd.f32 %v437, %v1308
        %v1325 = vadd.f32 %v438, %v1309
        %v1326 = vadd.f32 %v439, %v1310
        %v1335 = vrot.slane %v1319, 6
        %v1336 = vrot.slane %v1320, 5
        %v1337 = vsel %vm401, %v1336, %v1335
        %v1338 = vrot.slane %v1321, 4
        %v1339 = vsel %vm404, %v1338, %v1337
        %v1340 = vrot.slane %v1322, 3
        %v1341 = vsel %vm407, %v1340, %v1339
        %v1342 = vrot.slane %v1323, 2
        %v1343 = vsel %vm410, %v1342, %v1341
        %v1344 = vrot.slane %v1324, 1
        %v1345 = vsel %vm413, %v1344, %v1343
        %v1346 = vsel %vm416, %v1325, %v1345
        %v1347 = vrot.slane %v1326, 7
        %v1348 = vsel %vm419, %v1347, %v1346
        %1349 = vrot.lane.b32.xlu0 %v1348, 96
        %v1350 = vpop.permute.xlu0 %1349
        %1352 = vst.msk [vmem:[#allocation2 + $0x10] sm:$0xff] %vm872, %v1350
        %v1353 = vrot.slane %v352, 7
        %v1354 = vrot.slane %v357, 6
        %v1355 = vsel %vm401, %v1354, %v1353
        %v1356 = vrot.slane %v362, 5
        %v1357 = vsel %vm404, %v1356, %v1355
        %v1358 = vrot.slane %v367, 4
        %v1359 = vsel %vm407, %v1358, %v1357
        %v1360 = vrot.slane %v372, 3
        %v1361 = vsel %vm410, %v1360, %v1359
        %v1362 = vrot.slane %v377, 2
        %v1363 = vsel %vm413, %v1362, %v1361
        %v1364 = vrot.slane %v382, 1
        %v1365 = vsel %vm416, %v1364, %v1363
        %v1366 = vsel %vm419, %v387, %v1365
        %1367 = vrot.lane.b32.xlu0 %v1366, 112
        %v1368 = vpop.permute.xlu0 %1367
        %1370 = vst.msk [vmem:[#allocation2 + $0x10] sm:$0xff] %vm947, %v1368
        %v1371 = vld [vmem:[%s2] ss:$2 sm:$0x3]
        %s1372 = scalar_lea.vmem %s2, 1
        %v1373 = vld [vmem:[%s1372] ss:$2 sm:$0x3]
        %s1374 = scalar_lea.vmem %s3, 8
        %v1375 = vld [vmem:[%s1374] sm:$0xff]
        %v1376 = vld [vmem:[#allocation2] sm:$0xff]
        %v1377 = vld [vmem:[#allocation2 + $0x8] sm:$0xff]
        %v1378 = vld [vmem:[#allocation2 + $0x10] sm:$0xff]
        %s1379 = scalar_lea.vmem %s3, 32
        %v1380 = vld [vmem:[%s1379] sm:$0xff]
        %v1382 = vsel %vm260, %v1380, 0
        %1384 = vmatprep.subr.mxu0 %v1378
        %1385 = vmatpush1.msra.mxu0 %v1377
        %1386 = vmatprep.subr.mxu0 0.0
        %1387 = vmatpush1.msra.mxu0 0.0
        %1388 = vmatprep.subr.mxu0 0.0
        %1389 = vmatpush1.msra.mxu0 0.0
        %1390 = vmatprep.subr.mxu0 0.0
        %1391 = vmatpush1.msra.mxu0 0.0
        %1392 = vmatprep.subr.mxu0 0.0
        %1393 = vmatpush1.msra.mxu0 0.0
        %1394 = vmatprep.subr.mxu0 0.0
        %1395 = vmatpush1.msra.mxu0 0.0
        %1396 = vmatprep.subr.mxu0 0.0
        %1397 = vmatpush1.msra.mxu0 0.0
        %1398 = vmatprep.subr.mxu0 0.0
        %1399 = vmatpush1.msra.mxu0 0.0
        %1400 = vmatprep.subr.mxu0 0.0
        %1401 = vmatpush1.msra.mxu0 0.0
        %1402 = vmatprep.subr.mxu0 0.0
        %1403 = vmatpush1.msra.mxu0 0.0
        %1404 = vmatprep.subr.mxu0 0.0
        %1405 = vmatpush1.msra.mxu0 0.0
        %1406 = vmatprep.subr.mxu0 0.0
        %1407 = vmatpush1.msra.mxu0 0.0
        %1408 = vmatprep.subr.mxu0 0.0
        %1409 = vmatpush1.msra.mxu0 0.0
        %1410 = vmatprep.subr.mxu0 0.0
        %1411 = vmatpush1.msra.mxu0 0.0
        %1412 = vmatprep.subr.mxu0 0.0
        %1413 = vmatpush1.msra.mxu0 0.0
        %1414 = vmatprep.subr.mxu0 0.0
        %1415 = vmatpush1.msra.mxu0 0.0
        %1416 = vmatprep.subr.mxu0 0.0
        %1417 = vmatpush1.msra.mxu0 0.0
        %1418 = vmatprep.subr.mxu0 0.0
        %1419 = vmatpush1.msra.mxu0 0.0
        %1420 = vmatprep.subr.mxu0 0.0
        %1421 = vmatpush1.msra.mxu0 0.0
        %1422 = vmatprep.subr.mxu0 0.0
        %1423 = vmatpush1.msra.mxu0 0.0
        %1424 = vmatprep.subr.mxu0 0.0
        %1425 = vmatpush1.msra.mxu0 0.0
        %1426 = vmatprep.subr.mxu0 0.0
        %1427 = vmatpush1.msra.mxu0 0.0
        %1428 = vmatprep.subr.mxu0 0.0
        %1429 = vmatpush1.msra.mxu0 0.0
        %1430 = vmatprep.subr.mxu0 0.0
        %1431 = vmatpush1.msra.mxu0 0.0
        %1432 = vmatprep.subr.mxu0 0.0
        %1433 = vmatpush1.msra.mxu0 0.0
        %1434 = vmatprep.subr.mxu0 0.0
        %1435 = vmatpush1.msra.mxu0 0.0
        %1436 = vmatprep.subr.mxu0 0.0
        %1437 = vmatpush1.msra.mxu0 0.0
        %1438 = vmatprep.subr.mxu0 0.0
        %1439 = vmatpush1.msra.mxu0 0.0
        %1440 = vmatprep.subr.mxu0 0.0
        %1441 = vmatpush1.msra.mxu0 0.0
        %1442 = vmatprep.subr.mxu0 0.0
        %1443 = vmatpush1.msra.mxu0 0.0
        %1444 = vmatprep.subr.mxu0 0.0
        %1445 = vmatpush1.msra.mxu0 0.0
        %1446 = vmatprep.subr.mxu0 0.0
        %1447 = vmatpush1.msra.mxu0 0.0
        %1448 = vmatprep.mubr.f32.mxu0 0.0
        %1449 = vmatmul.mubr.f32.gmra.mrb[0].mxu0 %v1382
        %v1450 = vpop.f32.mrb[0].mxu0
        %v1451 = vadd.f32 0.0, %v1450
        %v1452 = vpop.f32.mrb[0].mxu0
        %v1453 = vadd.f32 0.0, %v1452
        %1454 = vdwg.mxu0
        %1458 = vrot.lane.b32.xlu0 %v1376, 16
        %v1459 = vpop.permute.xlu0 %1458
        %1460 = vrot.lane.b32.xlu0 %v1377, 16
        %v1461 = vpop.permute.xlu0 %1460
        %1462 = vrot.lane.b32.xlu0 %v1378, 16
        %v1463 = vpop.permute.xlu0 %1462
        %v1464 = vsel %vm422, %v1459, %v1461
        %v1465 = vsel %vm422, %v1461, %v1463
        %v1469 = vsel %vm260, %v1375, 0
        %1471 = vmatprep.subr.mxu0 %v1465
        %1472 = vmatpush1.msra.mxu0 %v1464
        %1473 = vmatprep.subr.mxu0 0.0
        %1474 = vmatpush1.msra.mxu0 0.0
        %1475 = vmatprep.subr.mxu0 0.0
        %1476 = vmatpush1.msra.mxu0 0.0
        %1477 = vmatprep.subr.mxu0 0.0
        %1478 = vmatpush1.msra.mxu0 0.0
        %1479 = vmatprep.subr.mxu0 0.0
        %1480 = vmatpush1.msra.mxu0 0.0
        %1481 = vmatprep.subr.mxu0 0.0
        %1482 = vmatpush1.msra.mxu0 0.0
        %1483 = vmatprep.subr.mxu0 0.0
        %1484 = vmatpush1.msra.mxu0 0.0
        %1485 = vmatprep.subr.mxu0 0.0
        %1486 = vmatpush1.msra.mxu0 0.0
        %1487 = vmatprep.subr.mxu0 0.0
        %1488 = vmatpush1.msra.mxu0 0.0
        %1489 = vmatprep.subr.mxu0 0.0
        %1490 = vmatpush1.msra.mxu0 0.0
        %1491 = vmatprep.subr.mxu0 0.0
        %1492 = vmatpush1.msra.mxu0 0.0
        %1493 = vmatprep.subr.mxu0 0.0
        %1494 = vmatpush1.msra.mxu0 0.0
        %1495 = vmatprep.subr.mxu0 0.0
        %1496 = vmatpush1.msra.mxu0 0.0
        %1497 = vmatprep.subr.mxu0 0.0
        %1498 = vmatpush1.msra.mxu0 0.0
        %1499 = vmatprep.subr.mxu0 0.0
        %1500 = vmatpush1.msra.mxu0 0.0
        %1501 = vmatprep.subr.mxu0 0.0
        %1502 = vmatpush1.msra.mxu0 0.0
        %1503 = vmatprep.subr.mxu0 0.0
        %1504 = vmatpush1.msra.mxu0 0.0
        %1505 = vmatprep.subr.mxu0 0.0
        %1506 = vmatpush1.msra.mxu0 0.0
        %1507 = vmatprep.subr.mxu0 0.0
        %1508 = vmatpush1.msra.mxu0 0.0
        %1509 = vmatprep.subr.mxu0 0.0
        %1510 = vmatpush1.msra.mxu0 0.0
        %1511 = vmatprep.subr.mxu0 0.0
        %1512 = vmatpush1.msra.mxu0 0.0
        %1513 = vmatprep.subr.mxu0 0.0
        %1514 = vmatpush1.msra.mxu0 0.0
        %1515 = vmatprep.subr.mxu0 0.0
        %1516 = vmatpush1.msra.mxu0 0.0
        %1517 = vmatprep.subr.mxu0 0.0
        %1518 = vmatpush1.msra.mxu0 0.0
        %1519 = vmatprep.subr.mxu0 0.0
        %1520 = vmatpush1.msra.mxu0 0.0
        %1521 = vmatprep.subr.mxu0 0.0
        %1522 = vmatpush1.msra.mxu0 0.0
        %1523 = vmatprep.subr.mxu0 0.0
        %1524 = vmatpush1.msra.mxu0 0.0
        %1525 = vmatprep.subr.mxu0 0.0
        %1526 = vmatpush1.msra.mxu0 0.0
        %1527 = vmatprep.subr.mxu0 0.0
        %1528 = vmatpush1.msra.mxu0 0.0
        %1529 = vmatprep.subr.mxu0 0.0
        %1530 = vmatpush1.msra.mxu0 0.0
        %1531 = vmatprep.subr.mxu0 0.0
        %1532 = vmatpush1.msra.mxu0 0.0
        %1533 = vmatprep.subr.mxu0 0.0
        %1534 = vmatpush1.msra.mxu0 0.0
        %1535 = vmatprep.mubr.f32.mxu0 0.0
        %1536 = vmatmul.mubr.f32.gmra.mrb[0].mxu0 %v1469
        %v1537 = vpop.f32.mrb[0].mxu0
        %v1538 = vadd.f32 %v1451, %v1537
        %v1539 = vpop.f32.mrb[0].mxu0
        %v1540 = vadd.f32 %v1453, %v1539
        %1541 = vdwg.mxu0
        %s1542 = scalar_lea.vmem %s3, 56
        %v1543 = vld [vmem:[%s1542] sm:$0xff]
        %v1544 = vld [vmem:[#allocation2 + $0x8] sm:$0xff]
        %v1545 = vld [vmem:[#allocation2 + $0x10] sm:$0xff]
        %v1546 = vld [vmem:[#allocation2 + $0x18] sm:$0xff]
        %1550 = vrot.lane.b32.xlu0 %v1544, 112
        %v1551 = vpop.permute.xlu0 %1550
        %1552 = vrot.lane.b32.xlu0 %v1545, 112
        %v1553 = vpop.permute.xlu0 %1552
        %1554 = vrot.lane.b32.xlu0 %v1546, 112
        %v1555 = vpop.permute.xlu0 %1554
        %vm1556 = vcmask 916480
        %v1557 = vsel %vm1556, %v1551, %v1553
        %v1558 = vsel %vm1556, %v1553, %v1555
        %v1562 = vsel %vm260, %v1543, 0
        %1564 = vmatprep.subr.mxu0 %v1558
        %1565 = vmatpush1.msra.mxu0 %v1557
        %1566 = vmatprep.subr.mxu0 0.0
        %1567 = vmatpush1.msra.mxu0 0.0
        %1568 = vmatprep.subr.mxu0 0.0
        %1569 = vmatpush1.msra.mxu0 0.0
        %1570 = vmatprep.subr.mxu0 0.0
        %1571 = vmatpush1.msra.mxu0 0.0
        %1572 = vmatprep.subr.mxu0 0.0
        %1573 = vmatpush1.msra.mxu0 0.0
        %1574 = vmatprep.subr.mxu0 0.0
        %1575 = vmatpush1.msra.mxu0 0.0
        %1576 = vmatprep.subr.mxu0 0.0
        %1577 = vmatpush1.msra.mxu0 0.0
        %1578 = vmatprep.subr.mxu0 0.0
        %1579 = vmatpush1.msra.mxu0 0.0
        %1580 = vmatprep.subr.mxu0 0.0
        %1581 = vmatpush1.msra.mxu0 0.0
        %1582 = vmatprep.subr.mxu0 0.0
        %1583 = vmatpush1.msra.mxu0 0.0
        %1584 = vmatprep.subr.mxu0 0.0
        %1585 = vmatpush1.msra.mxu0 0.0
        %1586 = vmatprep.subr.mxu0 0.0
        %1587 = vmatpush1.msra.mxu0 0.0
        %1588 = vmatprep.subr.mxu0 0.0
        %1589 = vmatpush1.msra.mxu0 0.0
        %1590 = vmatprep.subr.mxu0 0.0
        %1591 = vmatpush1.msra.mxu0 0.0
        %1592 = vmatprep.subr.mxu0 0.0
        %1593 = vmatpush1.msra.mxu0 0.0
        %1594 = vmatprep.subr.mxu0 0.0
        %1595 = vmatpush1.msra.mxu0 0.0
        %1596 = vmatprep.subr.mxu0 0.0
        %1597 = vmatpush1.msra.mxu0 0.0
        %1598 = vmatprep.subr.mxu0 0.0
        %1599 = vmatpush1.msra.mxu0 0.0
        %1600 = vmatprep.subr.mxu0 0.0
        %1601 = vmatpush1.msra.mxu0 0.0
        %1602 = vmatprep.subr.mxu0 0.0
        %1603 = vmatpush1.msra.mxu0 0.0
        %1604 = vmatprep.subr.mxu0 0.0
        %1605 = vmatpush1.msra.mxu0 0.0
        %1606 = vmatprep.subr.mxu0 0.0
        %1607 = vmatpush1.msra.mxu0 0.0
        %1608 = vmatprep.subr.mxu0 0.0
        %1609 = vmatpush1.msra.mxu0 0.0
        %1610 = vmatprep.subr.mxu0 0.0
        %1611 = vmatpush1.msra.mxu0 0.0
        %1612 = vmatprep.subr.mxu0 0.0
        %1613 = vmatpush1.msra.mxu0 0.0
        %1614 = vmatprep.subr.mxu0 0.0
        %1615 = vmatpush1.msra.mxu0 0.0
        %1616 = vmatprep.subr.mxu0 0.0
        %1617 = vmatpush1.msra.mxu0 0.0
        %1618 = vmatprep.subr.mxu0 0.0
        %1619 = vmatpush1.msra.mxu0 0.0
        %1620 = vmatprep.subr.mxu0 0.0
        %1621 = vmatpush1.msra.mxu0 0.0
        %1622 = vmatprep.subr.mxu0 0.0
        %1623 = vmatpush1.msra.mxu0 0.0
        %1624 = vmatprep.subr.mxu0 0.0
        %1625 = vmatpush1.msra.mxu0 0.0
        %1626 = vmatprep.subr.mxu0 0.0
        %1627 = vmatpush1.msra.mxu0 0.0
        %1628 = vmatprep.mubr.f32.mxu0 0.0
        %1629 = vmatmul.mubr.f32.gmra.mrb[0].mxu0 %v1562
        %v1630 = vpop.f32.mrb[0].mxu0
        %v1631 = vadd.f32 0.0, %v1630
        %v1632 = vpop.f32.mrb[0].mxu0
        %v1633 = vadd.f32 0.0, %v1632
        %1634 = vdwg.mxu0
        %v1635 = vadd.f32 %v1538, %v1631
        %v1636 = vadd.f32 %v1540, %v1633
        %v1637 = vadd.f32 %v1635, 0.0
        %v1638 = vadd.f32 %v1636, 0.0
        %v1639 = vld [vmem:[%s3] sm:$0xff]
        %s1640 = scalar_lea.vmem %s3, 24
        %v1641 = vld [vmem:[%s1640] sm:$0xff]
        %1642 = vrot.lane.b32.xlu0 %v1376, 1
        %v1643 = vpop.permute.xlu0 %1642
        %1644 = vrot.lane.b32.xlu0 %v1377, 1
        %v1645 = vpop.permute.xlu0 %1644
        %1646 = vrot.lane.b32.xlu0 %v1378, 1
        %v1647 = vpop.permute.xlu0 %1646
        %vm1648 = vcmask 7168
        %v1649 = vsel %vm1648, %v1643, %v1645
        %v1650 = vsel %vm1648, %v1645, %v1647
        %v1654 = vsel %vm260, %v1641, 0
        %1656 = vmatprep.subr.mxu0 %v1650
        %1657 = vmatpush1.msra.mxu0 %v1649
        %1658 = vmatprep.subr.mxu0 0.0
        %1659 = vmatpush1.msra.mxu0 0.0
        %1660 = vmatprep.subr.mxu0 0.0
        %1661 = vmatpush1.msra.mxu0 0.0
        %1662 = vmatprep.subr.mxu0 0.0
        %1663 = vmatpush1.msra.mxu0 0.0
        %1664 = vmatprep.subr.mxu0 0.0
        %1665 = vmatpush1.msra.mxu0 0.0
        %1666 = vmatprep.subr.mxu0 0.0
        %1667 = vmatpush1.msra.mxu0 0.0
        %1668 = vmatprep.subr.mxu0 0.0
        %1669 = vmatpush1.msra.mxu0 0.0
        %1670 = vmatprep.subr.mxu0 0.0
        %1671 = vmatpush1.msra.mxu0 0.0
        %1672 = vmatprep.subr.mxu0 0.0
        %1673 = vmatpush1.msra.mxu0 0.0
        %1674 = vmatprep.subr.mxu0 0.0
        %1675 = vmatpush1.msra.mxu0 0.0
        %1676 = vmatprep.subr.mxu0 0.0
        %1677 = vmatpush1.msra.mxu0 0.0
        %1678 = vmatprep.subr.mxu0 0.0
        %1679 = vmatpush1.msra.mxu0 0.0
        %1680 = vmatprep.subr.mxu0 0.0
        %1681 = vmatpush1.msra.mxu0 0.0
        %1682 = vmatprep.subr.mxu0 0.0
        %1683 = vmatpush1.msra.mxu0 0.0
        %1684 = vmatprep.subr.mxu0 0.0
        %1685 = vmatpush1.msra.mxu0 0.0
        %1686 = vmatprep.subr.mxu0 0.0
        %1687 = vmatpush1.msra.mxu0 0.0
        %1688 = vmatprep.subr.mxu0 0.0
        %1689 = vmatpush1.msra.mxu0 0.0
        %1690 = vmatprep.subr.mxu0 0.0
        %1691 = vmatpush1.msra.mxu0 0.0
        %1692 = vmatprep.subr.mxu0 0.0
        %1693 = vmatpush1.msra.mxu0 0.0
        %1694 = vmatprep.subr.mxu0 0.0
        %1695 = vmatpush1.msra.mxu0 0.0
        %1696 = vmatprep.subr.mxu0 0.0
        %1697 = vmatpush1.msra.mxu0 0.0
        %1698 = vmatprep.subr.mxu0 0.0
        %1699 = vmatpush1.msra.mxu0 0.0
        %1700 = vmatprep.subr.mxu0 0.0
        %1701 = vmatpush1.msra.mxu0 0.0
        %1702 = vmatprep.subr.mxu0 0.0
        %1703 = vmatpush1.msra.mxu0 0.0
        %1704 = vmatprep.subr.mxu0 0.0
        %1705 = vmatpush1.msra.mxu0 0.0
        %1706 = vmatprep.subr.mxu0 0.0
        %1707 = vmatpush1.msra.mxu0 0.0
        %1708 = vmatprep.subr.mxu0 0.0
        %1709 = vmatpush1.msra.mxu0 0.0
        %1710 = vmatprep.subr.mxu0 0.0
        %1711 = vmatpush1.msra.mxu0 0.0
        %1712 = vmatprep.subr.mxu0 0.0
        %1713 = vmatpush1.msra.mxu0 0.0
        %1714 = vmatprep.subr.mxu0 0.0
        %1715 = vmatpush1.msra.mxu0 0.0
        %1716 = vmatprep.subr.mxu0 0.0
        %1717 = vmatpush1.msra.mxu0 0.0
        %1718 = vmatprep.subr.mxu0 0.0
        %1719 = vmatpush1.msra.mxu0 0.0
        %1720 = vmatprep.mubr.f32.mxu0 0.0
        %1721 = vmatmul.mubr.f32.gmra.mrb[0].mxu0 %v1654
        %v1722 = vpop.f32.mrb[0].mxu0
        %v1723 = vadd.f32 0.0, %v1722
        %v1724 = vpop.f32.mrb[0].mxu0
        %v1725 = vadd.f32 0.0, %v1724
        %1726 = vdwg.mxu0
        %1727 = vrot.lane.b32.xlu0 %v1376, 17
        %v1728 = vpop.permute.xlu0 %1727
        %1729 = vrot.lane.b32.xlu0 %v1377, 17
        %v1730 = vpop.permute.xlu0 %1729
        %1731 = vrot.lane.b32.xlu0 %v1378, 17
        %v1732 = vpop.permute.xlu0 %1731
        %vm1733 = vcmask 138240
        %v1734 = vsel %vm1733, %v1728, %v1730
        %v1735 = vsel %vm1733, %v1730, %v1732
        %v1739 = vsel %vm260, %v1639, 0
        %1741 = vmatprep.subr.mxu0 %v1735
        %1742 = vmatpush1.msra.mxu0 %v1734
        %1743 = vmatprep.subr.mxu0 0.0
        %1744 = vmatpush1.msra.mxu0 0.0
        %1745 = vmatprep.subr.mxu0 0.0
        %1746 = vmatpush1.msra.mxu0 0.0
        %1747 = vmatprep.subr.mxu0 0.0
        %1748 = vmatpush1.msra.mxu0 0.0
        %1749 = vmatprep.subr.mxu0 0.0
        %1750 = vmatpush1.msra.mxu0 0.0
        %1751 = vmatprep.subr.mxu0 0.0
        %1752 = vmatpush1.msra.mxu0 0.0
        %1753 = vmatprep.subr.mxu0 0.0
        %1754 = vmatpush1.msra.mxu0 0.0
        %1755 = vmatprep.subr.mxu0 0.0
        %1756 = vmatpush1.msra.mxu0 0.0
        %1757 = vmatprep.subr.mxu0 0.0
        %1758 = vmatpush1.msra.mxu0 0.0
        %1759 = vmatprep.subr.mxu0 0.0
        %1760 = vmatpush1.msra.mxu0 0.0
        %1761 = vmatprep.subr.mxu0 0.0
        %1762 = vmatpush1.msra.mxu0 0.0
        %1763 = vmatprep.subr.mxu0 0.0
        %1764 = vmatpush1.msra.mxu0 0.0
        %1765 = vmatprep.subr.mxu0 0.0
        %1766 = vmatpush1.msra.mxu0 0.0
        %1767 = vmatprep.subr.mxu0 0.0
        %1768 = vmatpush1.msra.mxu0 0.0
        %1769 = vmatprep.subr.mxu0 0.0
        %1770 = vmatpush1.msra.mxu0 0.0
        %1771 = vmatprep.subr.mxu0 0.0
        %1772 = vmatpush1.msra.mxu0 0.0
        %1773 = vmatprep.subr.mxu0 0.0
        %1774 = vmatpush1.msra.mxu0 0.0
        %1775 = vmatprep.subr.mxu0 0.0
        %1776 = vmatpush1.msra.mxu0 0.0
        %1777 = vmatprep.subr.mxu0 0.0
        %1778 = vmatpush1.msra.mxu0 0.0
        %1779 = vmatprep.subr.mxu0 0.0
        %1780 = vmatpush1.msra.mxu0 0.0
        %1781 = vmatprep.subr.mxu0 0.0
        %1782 = vmatpush1.msra.mxu0 0.0
        %1783 = vmatprep.subr.mxu0 0.0
        %1784 = vmatpush1.msra.mxu0 0.0
        %1785 = vmatprep.subr.mxu0 0.0
        %1786 = vmatpush1.msra.mxu0 0.0
        %1787 = vmatprep.subr.mxu0 0.0
        %1788 = vmatpush1.msra.mxu0 0.0
        %1789 = vmatprep.subr.mxu0 0.0
        %1790 = vmatpush1.msra.mxu0 0.0
        %1791 = vmatprep.subr.mxu0 0.0
        %1792 = vmatpush1.msra.mxu0 0.0
        %1793 = vmatprep.subr.mxu0 0.0
        %1794 = vmatpush1.msra.mxu0 0.0
        %1795 = vmatprep.subr.mxu0 0.0
        %1796 = vmatpush1.msra.mxu0 0.0
        %1797 = vmatprep.subr.mxu0 0.0
        %1798 = vmatpush1.msra.mxu0 0.0
        %1799 = vmatprep.subr.mxu0 0.0
        %1800 = vmatpush1.msra.mxu0 0.0
        %1801 = vmatprep.subr.mxu0 0.0
        %1802 = vmatpush1.msra.mxu0 0.0
        %1803 = vmatprep.subr.mxu0 0.0
        %1804 = vmatpush1.msra.mxu0 0.0
        %1805 = vmatprep.mubr.f32.mxu0 0.0
        %1806 = vmatmul.mubr.f32.gmra.mrb[0].mxu0 %v1739
        %v1807 = vpop.f32.mrb[0].mxu0
        %v1808 = vadd.f32 %v1723, %v1807
        %v1809 = vpop.f32.mrb[0].mxu0
        %v1810 = vadd.f32 %v1725, %v1809
        %1811 = vdwg.mxu0
        %s1812 = scalar_lea.vmem %s3, 48
        %v1813 = vld [vmem:[%s1812] sm:$0xff]
        %1814 = vrot.lane.b32.xlu0 %v1544, 113
        %v1815 = vpop.permute.xlu0 %1814
        %1816 = vrot.lane.b32.xlu0 %v1545, 113
        %v1817 = vpop.permute.xlu0 %1816
        %1818 = vrot.lane.b32.xlu0 %v1546, 113
        %v1819 = vpop.permute.xlu0 %1818
        %vm1820 = vcmask 924672
        %v1821 = vsel %vm1820, %v1815, %v1817
        %v1822 = vsel %vm1820, %v1817, %v1819
        %v1826 = vsel %vm260, %v1813, 0
        %1828 = vmatprep.subr.mxu0 %v1822
        %1829 = vmatpush1.msra.mxu0 %v1821
        %1830 = vmatprep.subr.mxu0 0.0
        %1831 = vmatpush1.msra.mxu0 0.0
        %1832 = vmatprep.subr.mxu0 0.0
        %1833 = vmatpush1.msra.mxu0 0.0
        %1834 = vmatprep.subr.mxu0 0.0
        %1835 = vmatpush1.msra.mxu0 0.0
        %1836 = vmatprep.subr.mxu0 0.0
        %1837 = vmatpush1.msra.mxu0 0.0
        %1838 = vmatprep.subr.mxu0 0.0
        %1839 = vmatpush1.msra.mxu0 0.0
        %1840 = vmatprep.subr.mxu0 0.0
        %1841 = vmatpush1.msra.mxu0 0.0
        %1842 = vmatprep.subr.mxu0 0.0
        %1843 = vmatpush1.msra.mxu0 0.0
        %1844 = vmatprep.subr.mxu0 0.0
        %1845 = vmatpush1.msra.mxu0 0.0
        %1846 = vmatprep.subr.mxu0 0.0
        %1847 = vmatpush1.msra.mxu0 0.0
        %1848 = vmatprep.subr.mxu0 0.0
        %1849 = vmatpush1.msra.mxu0 0.0
        %1850 = vmatprep.subr.mxu0 0.0
        %1851 = vmatpush1.msra.mxu0 0.0
        %1852 = vmatprep.subr.mxu0 0.0
        %1853 = vmatpush1.msra.mxu0 0.0
        %1854 = vmatprep.subr.mxu0 0.0
        %1855 = vmatpush1.msra.mxu0 0.0
        %1856 = vmatprep.subr.mxu0 0.0
        %1857 = vmatpush1.msra.mxu0 0.0
        %1858 = vmatprep.subr.mxu0 0.0
        %1859 = vmatpush1.msra.mxu0 0.0
        %1860 = vmatprep.subr.mxu0 0.0
        %1861 = vmatpush1.msra.mxu0 0.0
        %1862 = vmatprep.subr.mxu0 0.0
        %1863 = vmatpush1.msra.mxu0 0.0
        %1864 = vmatprep.subr.mxu0 0.0
        %1865 = vmatpush1.msra.mxu0 0.0
        %1866 = vmatprep.subr.mxu0 0.0
        %1867 = vmatpush1.msra.mxu0 0.0
        %1868 = vmatprep.subr.mxu0 0.0
        %1869 = vmatpush1.msra.mxu0 0.0
        %1870 = vmatprep.subr.mxu0 0.0
        %1871 = vmatpush1.msra.mxu0 0.0
        %1872 = vmatprep.subr.mxu0 0.0
        %1873 = vmatpush1.msra.mxu0 0.0
        %1874 = vmatprep.subr.mxu0 0.0
        %1875 = vmatpush1.msra.mxu0 0.0
        %1876 = vmatprep.subr.mxu0 0.0
        %1877 = vmatpush1.msra.mxu0 0.0
        %1878 = vmatprep.subr.mxu0 0.0
        %1879 = vmatpush1.msra.mxu0 0.0
        %1880 = vmatprep.subr.mxu0 0.0
        %1881 = vmatpush1.msra.mxu0 0.0
        %1882 = vmatprep.subr.mxu0 0.0
        %1883 = vmatpush1.msra.mxu0 0.0
        %1884 = vmatprep.subr.mxu0 0.0
        %1885 = vmatpush1.msra.mxu0 0.0
        %1886 = vmatprep.subr.mxu0 0.0
        %1887 = vmatpush1.msra.mxu0 0.0
        %1888 = vmatprep.subr.mxu0 0.0
        %1889 = vmatpush1.msra.mxu0 0.0
        %1890 = vmatprep.subr.mxu0 0.0
        %1891 = vmatpush1.msra.mxu0 0.0
        %1892 = vmatprep.mubr.f32.mxu0 0.0
        %1893 = vmatmul.mubr.f32.gmra.mrb[0].mxu0 %v1826
        %v1894 = vpop.f32.mrb[0].mxu0
        %v1895 = vadd.f32 0.0, %v1894
        %v1896 = vpop.f32.mrb[0].mxu0
        %v1897 = vadd.f32 0.0, %v1896
        %1898 = vdwg.mxu0
        %v1899 = vadd.f32 %v1808, %v1895
        %v1900 = vadd.f32 %v1810, %v1897
        %v1902 = vlaneseq
        %v1903 = vshrl.u32 %v1902, 7
        %v1904 = vsub.s32 0, %v1903
        %v1905 = vrot.slane %v1371, %v1904
        %v1906 = vlaneseq
        %v1907 = vshrl.u32 %v1906, 7
        %v1908 = vsub.s32 1, %v1907
        %v1909 = vrot.slane %v1371, %v1908
        %v1912 = vmul.f32 %v1899, %v1905
        %v1913 = vmul.f32 %v1900, %v1909
        %v1914 = vadd.f32 %v1637, %v1912
        %v1915 = vadd.f32 %v1638, %v1913
        %s1916 = scalar_lea.vmem %s3, 16
        %v1917 = vld [vmem:[%s1916] sm:$0xff]
        %s1918 = scalar_lea.vmem %s3, 40
        %v1919 = vld [vmem:[%s1918] sm:$0xff]
        %1920 = vrot.lane.b32.xlu0 %v1544, 127
        %v1921 = vpop.permute.xlu0 %1920
        %1922 = vrot.lane.b32.xlu0 %v1545, 127
        %v1923 = vpop.permute.xlu0 %1922
        %1924 = vrot.lane.b32.xlu0 %v1546, 127
        %v1925 = vpop.permute.xlu0 %1924
        %vm1926 = vcmask 1039360
        %v1927 = vsel %vm1926, %v1921, %v1923
        %v1928 = vsel %vm1926, %v1923, %v1925
        %v1932 = vsel %vm260, %v1919, 0
        %1934 = vmatprep.subr.mxu0 %v1928
        %1935 = vmatpush1.msra.mxu0 %v1927
        %1936 = vmatprep.subr.mxu0 0.0
        %1937 = vmatpush1.msra.mxu0 0.0
        %1938 = vmatprep.subr.mxu0 0.0
        %1939 = vmatpush1.msra.mxu0 0.0
        %1940 = vmatprep.subr.mxu0 0.0
        %1941 = vmatpush1.msra.mxu0 0.0
        %1942 = vmatprep.subr.mxu0 0.0
        %1943 = vmatpush1.msra.mxu0 0.0
        %1944 = vmatprep.subr.mxu0 0.0
        %1945 = vmatpush1.msra.mxu0 0.0
        %1946 = vmatprep.subr.mxu0 0.0
        %1947 = vmatpush1.msra.mxu0 0.0
        %1948 = vmatprep.subr.mxu0 0.0
        %1949 = vmatpush1.msra.mxu0 0.0
        %1950 = vmatprep.subr.mxu0 0.0
        %1951 = vmatpush1.msra.mxu0 0.0
        %1952 = vmatprep.subr.mxu0 0.0
        %1953 = vmatpush1.msra.mxu0 0.0
        %1954 = vmatprep.subr.mxu0 0.0
        %1955 = vmatpush1.msra.mxu0 0.0
        %1956 = vmatprep.subr.mxu0 0.0
        %1957 = vmatpush1.msra.mxu0 0.0
        %1958 = vmatprep.subr.mxu0 0.0
        %1959 = vmatpush1.msra.mxu0 0.0
        %1960 = vmatprep.subr.mxu0 0.0
        %1961 = vmatpush1.msra.mxu0 0.0
        %1962 = vmatprep.subr.mxu0 0.0
        %1963 = vmatpush1.msra.mxu0 0.0
        %1964 = vmatprep.subr.mxu0 0.0
        %1965 = vmatpush1.msra.mxu0 0.0
        %1966 = vmatprep.subr.mxu0 0.0
        %1967 = vmatpush1.msra.mxu0 0.0
        %1968 = vmatprep.subr.mxu0 0.0
        %1969 = vmatpush1.msra.mxu0 0.0
        %1970 = vmatprep.subr.mxu0 0.0
        %1971 = vmatpush1.msra.mxu0 0.0
        %1972 = vmatprep.subr.mxu0 0.0
        %1973 = vmatpush1.msra.mxu0 0.0
        %1974 = vmatprep.subr.mxu0 0.0
        %1975 = vmatpush1.msra.mxu0 0.0
        %1976 = vmatprep.subr.mxu0 0.0
        %1977 = vmatpush1.msra.mxu0 0.0
        %1978 = vmatprep.subr.mxu0 0.0
        %1979 = vmatpush1.msra.mxu0 0.0
        %1980 = vmatprep.subr.mxu0 0.0
        %1981 = vmatpush1.msra.mxu0 0.0
        %1982 = vmatprep.subr.mxu0 0.0
        %1983 = vmatpush1.msra.mxu0 0.0
        %1984 = vmatprep.subr.mxu0 0.0
        %1985 = vmatpush1.msra.mxu0 0.0
        %1986 = vmatprep.subr.mxu0 0.0
        %1987 = vmatpush1.msra.mxu0 0.0
        %1988 = vmatprep.subr.mxu0 0.0
        %1989 = vmatpush1.msra.mxu0 0.0
        %1990 = vmatprep.subr.mxu0 0.0
        %1991 = vmatpush1.msra.mxu0 0.0
        %1992 = vmatprep.subr.mxu0 0.0
        %1993 = vmatpush1.msra.mxu0 0.0
        %1994 = vmatprep.subr.mxu0 0.0
        %1995 = vmatpush1.msra.mxu0 0.0
        %1996 = vmatprep.subr.mxu0 0.0
        %1997 = vmatpush1.msra.mxu0 0.0
        %1998 = vmatprep.mubr.f32.mxu0 0.0
        %1999 = vmatmul.mubr.f32.gmra.mrb[0].mxu0 %v1932
        %v2000 = vpop.f32.mrb[0].mxu0
        %v2001 = vadd.f32 0.0, %v2000
        %v2002 = vpop.f32.mrb[0].mxu0
        %v2003 = vadd.f32 0.0, %v2002
        %2004 = vdwg.mxu0
        %2005 = vrot.lane.b32.xlu0 %v1376, 15
        %v2006 = vpop.permute.xlu0 %2005
        %2007 = vrot.lane.b32.xlu0 %v1377, 15
        %v2008 = vpop.permute.xlu0 %2007
        %2009 = vrot.lane.b32.xlu0 %v1378, 15
        %v2010 = vpop.permute.xlu0 %2009
        %vm2011 = vcmask 121856
        %v2012 = vsel %vm2011, %v2006, %v2008
        %v2013 = vsel %vm2011, %v2008, %v2010
        %v2017 = vsel %vm260, %v1917, 0
        %2019 = vmatprep.subr.mxu0 %v2013
        %2020 = vmatpush1.msra.mxu0 %v2012
        %2021 = vmatprep.subr.mxu0 0.0
        %2022 = vmatpush1.msra.mxu0 0.0
        %2023 = vmatprep.subr.mxu0 0.0
        %2024 = vmatpush1.msra.mxu0 0.0
        %2025 = vmatprep.subr.mxu0 0.0
        %2026 = vmatpush1.msra.mxu0 0.0
        %2027 = vmatprep.subr.mxu0 0.0
        %2028 = vmatpush1.msra.mxu0 0.0
        %2029 = vmatprep.subr.mxu0 0.0
        %2030 = vmatpush1.msra.mxu0 0.0
        %2031 = vmatprep.subr.mxu0 0.0
        %2032 = vmatpush1.msra.mxu0 0.0
        %2033 = vmatprep.subr.mxu0 0.0
        %2034 = vmatpush1.msra.mxu0 0.0
        %2035 = vmatprep.subr.mxu0 0.0
        %2036 = vmatpush1.msra.mxu0 0.0
        %2037 = vmatprep.subr.mxu0 0.0
        %2038 = vmatpush1.msra.mxu0 0.0
        %2039 = vmatprep.subr.mxu0 0.0
        %2040 = vmatpush1.msra.mxu0 0.0
        %2041 = vmatprep.subr.mxu0 0.0
        %2042 = vmatpush1.msra.mxu0 0.0
        %2043 = vmatprep.subr.mxu0 0.0
        %2044 = vmatpush1.msra.mxu0 0.0
        %2045 = vmatprep.subr.mxu0 0.0
        %2046 = vmatpush1.msra.mxu0 0.0
        %2047 = vmatprep.subr.mxu0 0.0
        %2048 = vmatpush1.msra.mxu0 0.0
        %2049 = vmatprep.subr.mxu0 0.0
        %2050 = vmatpush1.msra.mxu0 0.0
        %2051 = vmatprep.subr.mxu0 0.0
        %2052 = vmatpush1.msra.mxu0 0.0
        %2053 = vmatprep.subr.mxu0 0.0
        %2054 = vmatpush1.msra.mxu0 0.0
        %2055 = vmatprep.subr.mxu0 0.0
        %2056 = vmatpush1.msra.mxu0 0.0
        %2057 = vmatprep.subr.mxu0 0.0
        %2058 = vmatpush1.msra.mxu0 0.0
        %2059 = vmatprep.subr.mxu0 0.0
        %2060 = vmatpush1.msra.mxu0 0.0
        %2061 = vmatprep.subr.mxu0 0.0
        %2062 = vmatpush1.msra.mxu0 0.0
        %2063 = vmatprep.subr.mxu0 0.0
        %2064 = vmatpush1.msra.mxu0 0.0
        %2065 = vmatprep.subr.mxu0 0.0
        %2066 = vmatpush1.msra.mxu0 0.0
        %2067 = vmatprep.subr.mxu0 0.0
        %2068 = vmatpush1.msra.mxu0 0.0
        %2069 = vmatprep.subr.mxu0 0.0
        %2070 = vmatpush1.msra.mxu0 0.0
        %2071 = vmatprep.subr.mxu0 0.0
        %2072 = vmatpush1.msra.mxu0 0.0
        %2073 = vmatprep.subr.mxu0 0.0
        %2074 = vmatpush1.msra.mxu0 0.0
        %2075 = vmatprep.subr.mxu0 0.0
        %2076 = vmatpush1.msra.mxu0 0.0
        %2077 = vmatprep.subr.mxu0 0.0
        %2078 = vmatpush1.msra.mxu0 0.0
        %2079 = vmatprep.subr.mxu0 0.0
        %2080 = vmatpush1.msra.mxu0 0.0
        %2081 = vmatprep.subr.mxu0 0.0
        %2082 = vmatpush1.msra.mxu0 0.0
        %2083 = vmatprep.mubr.f32.mxu0 0.0
        %2084 = vmatmul.mubr.f32.gmra.mrb[0].mxu0 %v2017
        %v2085 = vpop.f32.mrb[0].mxu0
        %v2086 = vadd.f32 %v2001, %v2085
        %v2087 = vpop.f32.mrb[0].mxu0
        %v2088 = vadd.f32 %v2003, %v2087
        %2089 = vdwg.mxu0
        %s2090 = scalar_lea.vmem %s3, 64
        %v2091 = vld [vmem:[%s2090] sm:$0xff]
        %2092 = vrot.lane.b32.xlu0 %v1544, 111
        %v2093 = vpop.permute.xlu0 %2092
        %2094 = vrot.lane.b32.xlu0 %v1545, 111
        %v2095 = vpop.permute.xlu0 %2094
        %2096 = vrot.lane.b32.xlu0 %v1546, 111
        %v2097 = vpop.permute.xlu0 %2096
        %vm2098 = vcmask 908288
        %v2099 = vsel %vm2098, %v2093, %v2095
        %v2100 = vsel %vm2098, %v2095, %v2097
        %v2104 = vsel %vm260, %v2091, 0
        %2106 = vmatprep.subr.mxu0 %v2100
        %2107 = vmatpush1.msra.mxu0 %v2099
        %2108 = vmatprep.subr.mxu0 0.0
        %2109 = vmatpush1.msra.mxu0 0.0
        %2110 = vmatprep.subr.mxu0 0.0
        %2111 = vmatpush1.msra.mxu0 0.0
        %2112 = vmatprep.subr.mxu0 0.0
        %2113 = vmatpush1.msra.mxu0 0.0
        %2114 = vmatprep.subr.mxu0 0.0
        %2115 = vmatpush1.msra.mxu0 0.0
        %2116 = vmatprep.subr.mxu0 0.0
        %2117 = vmatpush1.msra.mxu0 0.0
        %2118 = vmatprep.subr.mxu0 0.0
        %2119 = vmatpush1.msra.mxu0 0.0
        %2120 = vmatprep.subr.mxu0 0.0
        %2121 = vmatpush1.msra.mxu0 0.0
        %2122 = vmatprep.subr.mxu0 0.0
        %2123 = vmatpush1.msra.mxu0 0.0
        %2124 = vmatprep.subr.mxu0 0.0
        %2125 = vmatpush1.msra.mxu0 0.0
        %2126 = vmatprep.subr.mxu0 0.0
        %2127 = vmatpush1.msra.mxu0 0.0
        %2128 = vmatprep.subr.mxu0 0.0
        %2129 = vmatpush1.msra.mxu0 0.0
        %2130 = vmatprep.subr.mxu0 0.0
        %2131 = vmatpush1.msra.mxu0 0.0
        %2132 = vmatprep.subr.mxu0 0.0
        %2133 = vmatpush1.msra.mxu0 0.0
        %2134 = vmatprep.subr.mxu0 0.0
        %2135 = vmatpush1.msra.mxu0 0.0
        %2136 = vmatprep.subr.mxu0 0.0
        %2137 = vmatpush1.msra.mxu0 0.0
        %2138 = vmatprep.subr.mxu0 0.0
        %2139 = vmatpush1.msra.mxu0 0.0
        %2140 = vmatprep.subr.mxu0 0.0
        %2141 = vmatpush1.msra.mxu0 0.0
        %2142 = vmatprep.subr.mxu0 0.0
        %2143 = vmatpush1.msra.mxu0 0.0
        %2144 = vmatprep.subr.mxu0 0.0
        %2145 = vmatpush1.msra.mxu0 0.0
        %2146 = vmatprep.subr.mxu0 0.0
        %2147 = vmatpush1.msra.mxu0 0.0
        %2148 = vmatprep.subr.mxu0 0.0
        %2149 = vmatpush1.msra.mxu0 0.0
        %2150 = vmatprep.subr.mxu0 0.0
        %2151 = vmatpush1.msra.mxu0 0.0
        %2152 = vmatprep.subr.mxu0 0.0
        %2153 = vmatpush1.msra.mxu0 0.0
        %2154 = vmatprep.subr.mxu0 0.0
        %2155 = vmatpush1.msra.mxu0 0.0
        %2156 = vmatprep.subr.mxu0 0.0
        %2157 = vmatpush1.msra.mxu0 0.0
        %2158 = vmatprep.subr.mxu0 0.0
        %2159 = vmatpush1.msra.mxu0 0.0
        %2160 = vmatprep.subr.mxu0 0.0
        %2161 = vmatpush1.msra.mxu0 0.0
        %2162 = vmatprep.subr.mxu0 0.0
        %2163 = vmatpush1.msra.mxu0 0.0
        %2164 = vmatprep.subr.mxu0 0.0
        %2165 = vmatpush1.msra.mxu0 0.0
        %2166 = vmatprep.subr.mxu0 0.0
        %2167 = vmatpush1.msra.mxu0 0.0
        %2168 = vmatprep.subr.mxu0 0.0
        %2169 = vmatpush1.msra.mxu0 0.0
        %2170 = vmatprep.mubr.f32.mxu0 0.0
        %2171 = vmatmul.mubr.f32.gmra.mrb[0].mxu0 %v2104
        %v2172 = vpop.f32.mrb[0].mxu0
        %v2173 = vadd.f32 0.0, %v2172
        %v2174 = vpop.f32.mrb[0].mxu0
        %v2175 = vadd.f32 0.0, %v2174
        %2176 = vdwg.mxu0
        %v2177 = vadd.f32 %v2086, %v2173
        %v2178 = vadd.f32 %v2088, %v2175
        %v2180 = vlaneseq
        %v2181 = vshrl.u32 %v2180, 7
        %v2182 = vsub.s32 0, %v2181
        %v2183 = vrot.slane %v1373, %v2182
        %v2184 = vlaneseq
        %v2185 = vshrl.u32 %v2184, 7
        %v2186 = vsub.s32 1, %v2185
        %v2187 = vrot.slane %v1373, %v2186
        %v2190 = vmul.f32 %v2177, %v2183
        %v2191 = vmul.f32 %v2178, %v2187
        %v2192 = vadd.f32 %v1914, %v2190
        %v2193 = vadd.f32 %v1915, %v2191
        %v2194 = vld [vmem:[%s4] sm:$0xff]
        %2196 = vset.pattern.permute.xlu0 0
        %2197 = vperm.xlu0 %2196, %v2194
        %v2198 = vpop.permute.xlu0 %2197
        %v2200 = vadd.f32 %v2192, %v2198
        %v2201 = vadd.f32 %v2193, %v2198
        %s2202 = sld [smem:[#allocation3]]
        %vm2203 = vcmp.ge.f32.partialorder %v2200, 0.0
        %vm2204 = vcmp.ge.f32.partialorder %v2201, 0.0
        %v2205 = vstv %s2202
        %v2206 = vmul.f32 %v2205, %v2200
        %v2207 = vmul.f32 %v2205, %v2201
        %v2208 = vsel %vm2203, %v2200, %v2206
        %v2209 = vsel %vm2204, %v2201, %v2207
        %2210 = vst [vmem:[%s245] sm:$0xff] %v2208
        %2211 = vst [vmem:[%s245 + $0x8] sm:$0xff] %v2209
        %s2212 = sand.u32 %s160, 1
        %s2213 = scalar_lea.sflag [#allocation5], %s2212
        %s2214 = sand.u32 %s160, 1
        %s2215 = smul.addr %s2214, 16
        %s2216 = scalar_lea.vmem [#allocation4], %s2215
        // Predicated region
        $region45: #{tpu_custom_call.1} parent=43 // pred_check
          %p2217 = pneg %p170
        $region46: #{tpu_custom_call.1} parent=43 // pred_check_branch
          %2219 = sbr.rel (%p2217) target = $region48
        $region47: #{tpu_custom_call.1} parent=43 // pred_region
          %s2221 = ssub.s32 256, 256
          %2222 = vsyncadd %s2213, %s2221
          %s2223 = smul.addr %s21, 2
          %s2224 = smul.addr %s2223, 128
          %s2225 = scalar_lea.hbm %s6, %s2224
          %s2227 = sshll.u32 %s2216, 4
          %s2228 = int_to_ptr.vmem [resolvable:$true] %s2227
          %2230 = dma.vmem_to_hbm [thread:$0]  %s2228, 256, %s2225, %s2213
        $region48: #{tpu_custom_call.1} parent=43 // pred_fallthru
          _
      $region44: #{tpu_custom_call.1} parent=5 // pred_fallthru
        _
      %p2231 = scmp.le.s32.totalorder 2, %s16
      // Predicated region
      $region49: #{tpu_custom_call.1} parent=5 // pred_check
        %p2232 = pneg %p2231
      $region50: #{tpu_custom_call.1} parent=5 // pred_check_branch
        %2234 = sbr.rel (%p2232) target = $region52
      $region51: #{tpu_custom_call.1} parent=5 // pred_region
        %s2235 = ssub.s32 %s16, 2
        // Predicated region
        $region53: #{tpu_custom_call.1} parent=51 // pred_check
          %p2236 = pneg %p176
        $region54: #{tpu_custom_call.1} parent=51 // pred_check_branch
          %2238 = sbr.rel (%p2236) target = $region56
        $region55: #{tpu_custom_call.1} parent=51 // pred_region
          %s2239 = sand.u32 %s161, 1
          %s2240 = scalar_lea.sflag [#allocation5], %s2239
          %s2241 = sand.u32 %s161, 1
          %s2242 = smul.addr %s2241, 16
          %s2243 = scalar_lea.vmem [#allocation4], %s2242
          %2244 = dma.done %s2240, 256
        $region56: #{tpu_custom_call.1} parent=51 // pred_fallthru
          _
      $region52: #{tpu_custom_call.1} parent=5 // pred_fallthru
        _
    $region6: #{tpu_custom_call.1} parent=1 // loop_footer
      %s20 = sadd.s32 1, %s16
    $region7: #{tpu_custom_call.1} parent=1 // loop_footer_branch
      %15 = sbr.rel target = $region3
    $region8: #{tpu_custom_call.1} parent=1 // loop_exit
      _
    %2245 = vsyncpa [#allocation5], 1
    %s2246 = scalar_lea.sflag [#allocation5], 1
    %2247 = vsyncpa %s2246, 1

</llo_original>
